<compile_context>
chip_gen: v7x
topology: tpu7x:2x2x1
jax: 0.10.0
libtpu: 0.0.40
codegen_flags: <defaults>
</compile_context>

<pallas_src>
from functools import partial

import jax
import jax.numpy as jnp
from jax.experimental import pallas as pl
from jax.experimental.pallas import tpu as pltpu


def _ceil_to(x, m):
    return ((x + m - 1) // m) * m


_VMEM_LIMIT = 32 * 1024 * 1024   # explicit budget; safe on v5e/v6e/v7x


# ----------------------------- Pallas kernels ------------------------------

def pallas_linear_fold_layout(xt, w, b, tl):
    """y[bt, :, l] = w @ xt[bt, :, l] + b, emitted directly in fold layout.

    xt : (BT, K, L_pad) bf16   (K = hidden, L_pad multiple of tl, tl multiple of 128)
    w  : (Np, K)        bf16   (Np = c_out padded to a multiple of 8)
    b  : (Np, 1)        f32
    out: (BT, Np, L_pad) f32   -- lane-dense, unmasked 128-wide stores.
    """
    BT, K, L_pad = xt.shape
    Np = w.shape[0]

    def kernel(x_ref, w_ref, b_ref, o_ref):
        acc = jnp.dot(w_ref[...], x_ref[0],
                      preferred_element_type=jnp.float32)
        o_ref[0] = (acc + b_ref[...]).astype(o_ref.dtype)

    # TODO(synk): at very large hidden add a trailing K-reduction grid axis with an
    # f32 VMEM accumulator; hidden<=512 fits a single block comfortably.
    return pl.pallas_call(
        kernel,
        out_shape=jax.ShapeDtypeStruct((BT, Np, L_pad), jnp.float32),
        grid=(BT, L_pad // tl),
        in_specs=[pl.BlockSpec((1, K, tl), lambda bi, li: (bi, 0, li)),
                  pl.BlockSpec((Np, K), lambda bi, li: (0, 0)),
                  pl.BlockSpec((Np, 1), lambda bi, li: (0, 0))],
        out_specs=pl.BlockSpec((1, Np, tl), lambda bi, li: (bi, 0, li)),
        compiler_params=pltpu.CompilerParams(
            dimension_semantics=("parallel", "parallel"),
            vmem_limit_bytes=_VMEM_LIMIT),
    )(xt, w, b)


def pallas_conv3x3_same(x_nchw, w_oihw, b, nct=1024):
    """3x3 conv, stride 1, padding 1 (PyTorch NCHW / OIHW semantics).

    Layout: channels on sublanes, a padded flat spatial raster on lanes, tiled over
    the raster in NCt-lane blocks.  Each grid step gets its NCt block plus a
    lane-aligned HALO block (a second BlockSpec view of the same flat array); each
    of the 9 taps is a constant lane shift di*Wc+dj of that (Cp, NCt+HALO) tile and
    is accumulated as its own small matmul -- no column-matrix staging.
    """
    B, Cin, H, W = x_nchw.shape
    Cout = w_oihw.shape[0]
    Wc = W + 2
    Cp = _ceil_to(Cin, 8)                      # sublane-aligned input channels
    Cop = _ceil_to(Cout, 8)                    # sublane-aligned output channels
    HALO = _ceil_to(2 * Wc + 2, 128)           # >= max tap offset, lane-aligned
    NCt = max(HALO, _ceil_to(min(nct, _ceil_to(H * Wc, 128)), HALO))
    NC_pad = _ceil_to(H * Wc, NCt)             # padded output raster width
    numL = NC_pad // NCt
    PADW = NC_pad + HALO                       # flat-input width actually read
    rows = -(-PADW // Wc)                      # padded-image rows needed (>= H+3)

    # Single pad: channel pad to Cp + conv halo + raster tail rows in ONE pass;
    # the flat reshape afterwards is free (contiguous).
    xp = jnp.pad(x_nchw, ((0, 0), (0, Cp - Cin), (1, rows - H - 1), (1, 1)))
    flat = xp.reshape(B, Cp, rows * Wc).astype(jnp.bfloat16)        # (B, Cp, FW>=PADW)

    # Weights tap-major (9, Cop, Cp) bf16; bias (Cop, 1) f32.
    wk = jnp.transpose(w_oihw, (2, 3, 0, 1)).reshape(9, Cout, Cin)
    wk = jnp.pad(wk, ((0, 0), (0, Cop - Cout), (0, Cp - Cin))).astype(jnp.bfloat16)
    bk = jnp.pad(b, (0, Cop - Cout)).reshape(Cop, 1).astype(jnp.float32)

    def kernel(x_ref, h_ref, w_ref, b_ref, o_ref, xbuf):
        xbuf[:, :NCt] = x_ref[0]               # lane-aligned stores (NCt % 128 == 0)
        xbuf[:, NCt:] = h_ref[0]
        xw = xbuf[...]                         # (Cp, NCt + HALO)
        acc = jnp.zeros((Cop, NCt), jnp.float32)
        for t in range(9):                     # static unroll over the 9 taps
            off = (t // 3) * Wc + (t % 3)      # flat-raster shift of tap (di, dj)
            acc = acc + jnp.dot(w_ref[t], xw[:, off:off + NCt],
                                preferred_element_type=jnp.float32)
        o_ref[0] = (acc + b_ref[...]).astype(o_ref.dtype)
        # TODO(synk): for tiny channel counts (Cp=8) a VPU broadcast-FMA path would
        # sidestep the mostly-idle MXU; at production Cp=128 per-tap matmuls are right.

    out = pl.pallas_call(
        kernel,
        out_shape=jax.ShapeDtypeStruct((B, Cop, NC_pad), x_nchw.dtype),
        grid=(B, numL),
        in_specs=[pl.BlockSpec((1, Cp, NCt), lambda bi, li: (bi, 0, li)),
                  pl.BlockSpec((1, Cp, HALO),
                               lambda bi, li: (bi, 0, (li + 1) * (NCt // HALO))),
                  pl.BlockSpec((9, Cop, Cp), lambda bi, li: (0, 0, 0)),
                  pl.BlockSpec((Cop, 1), lambda bi, li: (0, 0))],
        out_specs=pl.BlockSpec((1, Cop, NCt), lambda bi, li: (bi, 0, li)),
        scratch_shapes=[pltpu.VMEM((Cp, NCt + HALO), jnp.bfloat16)],
        compiler_params=pltpu.CompilerParams(
            dimension_semantics=("parallel", "parallel"),
            vmem_limit_bytes=_VMEM_LIMIT),
    )(flat, flat, wk, bk)

    # Drop the raster gap columns (j in [W, Wc)) and the lane/channel padding.
    return out[:, :Cout, :H * Wc].reshape(B, Cout, H, Wc)[:, :, :, :W]


# ------------------------------ JAX glue ops --------------------------------

def fold_jax(patches, output_size, kernel_size, stride, padding):
    # TODO(synk): F.fold (col2im overlap-add) stays in plain-JAX glue; the strided
    # scatter-adds have no clean Mosaic equivalent and jit fuses them with the rest.
    B, CKK, L = patches.shape
    kh, kw = kernel_size
    sh, sw = stride
    ph, pw = padding
    H, W = output_size
    C = CKK // (kh * kw)
    Lh = (H + 2 * ph - kh) // sh + 1
    Lw = (W + 2 * pw - kw) // sw + 1
    assert Lh * Lw == L
    p = patches.reshape(B, C, kh, kw, Lh, Lw)
    out = jnp.zeros((B, C, H + 2 * ph, W + 2 * pw), dtype=patches.dtype)
    for ki in range(kh):
        for kj in range(kw):
            out = out.at[:, :,
                         ki:ki + Lh * sh:sh,
                         kj:kj + Lw * sw:sw].add(p[:, :, ki, kj])
    return out[:, :, ph:ph + H, pw:pw + W]


@partial(jax.jit, static_argnums=(2, 3, 4, 5, 6))
def soft_comp_forward(params, x, t, output_size, kernel_size, stride, padding):
    # x: (b_, t, Lh, Lw, hidden) -- any 5-D tensor with trailing dim == hidden.
    b_, c_ = x.shape[0], x.shape[-1]
    BT = b_ * t
    L = x.size // (c_ * BT)                    # tokens per (b*t) image (= Lh*Lw)
    c_out = params["emb_w"].shape[0]

    # ---- embedding Linear, emitted directly in fold layout (BT, c_out, L) ----
    tl = min(512, _ceil_to(L, 128))            # 128..512 lane tile, clamped for tiny L
    L_pad = _ceil_to(L, tl)
    Np = _ceil_to(c_out, 8)
    xt = jnp.transpose(x.reshape(BT, L, c_), (0, 2, 1))             # (BT, hidden, L)
    xt = jnp.pad(xt, ((0, 0), (0, 0), (0, L_pad - L))).astype(jnp.bfloat16)
    wl = jnp.pad(params["emb_w"], ((0, Np - c_out), (0, 0))).astype(jnp.bfloat16)
    bl = jnp.pad(params["emb_b"], (0, Np - c_out)).reshape(Np, 1).astype(jnp.float32)
    patches = pallas_linear_fold_layout(xt, wl, bl, tl)[:, :c_out, :L]

    # ---- F.fold (overlap-add) + 3x3 "bias_conv" ----
    folded = fold_jax(patches, output_size, kernel_size, stride, padding)  # (BT,C,H,W)
    return pallas_conv3x3_same(folded, params["conv_w"], params["conv_b"])
    # NOTE: self.relu (LeakyReLU) is defined in __init__ but never used in forward().


def reference_forward(params, x, t, output_size, kernel_size, stride, padding):
    b_ = x.shape[0]
    c_ = x.shape[-1]
    x2 = x.reshape(b_, -1, c_)
    feat = jnp.einsum('bnk,ck->bnc', x2, params["emb_w"]) + params["emb_b"]
    c_out = feat.shape[-1]
    feat = jnp.transpose(feat.reshape(b_ * t, -1, c_out), (0, 2, 1))
    feat = fold_jax(feat, output_size, kernel_size, stride, padding)
    out = jax.lax.conv_general_dilated(
        feat, params["conv_w"], window_strides=(1, 1),
        padding=((1, 1), (1, 1)),
        dimension_numbers=('NCHW', 'OIHW', 'NCHW'))
    return out + params["conv_b"].reshape(1, -1, 1, 1)


# --------------------------------- main --------------------------------------

if __name__ == "__main__":
    channel, hidden = 4, 32
    kernel_size, stride, padding = (4, 4), (2, 2), (1, 1)
    output_size = (16, 16)
    b_, t = 2, 2
    Lh = (output_size[0] + 2 * padding[0] - kernel_size[0]) // stride[0] + 1
    Lw = (output_size[1] + 2 * padding[1] - kernel_size[1]) // stride[1] + 1
    c_out = kernel_size[0] * kernel_size[1] * channel

    key = jax.random.PRNGKey(0)
    kx, k0, k1, k2, k3 = jax.random.split(key, 5)
    x = jax.random.normal(kx, (b_, t, Lh, Lw, hidden), jnp.float32)

    params = dict(
        emb_w=jax.random.normal(k0, (c_out, hidden), jnp.float32) * 0.05,
        emb_b=jax.random.normal(k1, (c_out,), jnp.float32) * 0.05,
        conv_w=jax.random.normal(k2, (channel, channel, 3, 3), jnp.float32) * 0.05,
        conv_b=jax.random.normal(k3, (channel,), jnp.float32) * 0.05,
    )

    out = soft_comp_forward(params, x, t, output_size, kernel_size, stride, padding)
    out = jax.block_until_ready(out)

    ref = reference_forward(params, x, t, output_size, kernel_size, stride, padding)
    ref = jax.block_until_ready(ref)

    assert out.shape == (b_ * t, channel, output_size[0], output_size[1]), out.shape
    # bf16 MXU operands with f32 accumulation -> tolerance relaxed vs pure-f32.
    assert jnp.allclose(out, ref, atol=2e-2, rtol=2e-2), "mismatch vs JAX reference"

    print("KERNEL_OK")
</pallas_src>

<mosaic_0001>
module attributes {stable_mosaic.version = 11 : i64} {
  func.func @kernel(%arg0: i32, %arg1: i32, %arg2: memref<1x32x128xbf16, #tpu.memory_space<vmem>>, %arg3: memref<64x32xbf16, #tpu.memory_space<vmem>>, %arg4: memref<64x1xf32, #tpu.memory_space<vmem>>, %arg5: memref<1x64x128xf32, #tpu.memory_space<vmem>>) attributes {dimension_semantics = [#tpu.dimension_semantics<parallel>, #tpu.dimension_semantics<parallel>], iteration_bounds = array<i64: 4, 1>, scalar_prefetch = 0 : i64, scratch_operands = 0 : i64, tpu.core_type = #tpu.core_type<tc>, window_params = [{transform_indices = @transform_0, window_bounds = array<i64: 1, 32, 128>}, {pipeline_mode = #tpu.pipeline_mode<synchronous>, transform_indices = @transform_1, window_bounds = array<i64: 64, 32>}, {pipeline_mode = #tpu.pipeline_mode<synchronous>, transform_indices = @transform_2, window_bounds = array<i64: 64, 1>}, {transform_indices = @transform_3, window_bounds = array<i64: 1, 64, 128>}]} {
    %c0 = arith.constant 0 : index
    %c0_0 = arith.constant 0 : index
    %0 = vector.load %arg3[%c0, %c0_0] : memref<64x32xbf16, #tpu.memory_space<vmem>>, vector<64x32xbf16>
    %c0_1 = arith.constant 0 : index
    %c0_2 = arith.constant 0 : index
    %c0_3 = arith.constant 0 : index
    %1 = vector.load %arg2[%c0_1, %c0_2, %c0_3] : memref<1x32x128xbf16, #tpu.memory_space<vmem>>, vector<1x32x128xbf16>
    %2 = vector.shape_cast %1 : vector<1x32x128xbf16> to vector<32x128xbf16>
    %cst = arith.constant dense<0.000000e+00> : vector<64x128xf32>
    %3 = tpu.matmul %0, %2, %cst {dimension_numbers = #tpu.dot_dimension_numbers<[1], [0], [0], [1], [0, 0, 1, 1], [], []>} : vector<64x32xbf16>, vector<32x128xbf16>, vector<64x128xf32> -> vector<64x128xf32>
    %c0_4 = arith.constant 0 : index
    %c0_5 = arith.constant 0 : index
    %4 = vector.load %arg4[%c0_4, %c0_5] : memref<64x1xf32, #tpu.memory_space<vmem>>, vector<64x1xf32>
    %5 = vector.broadcast %4 : vector<64x1xf32> to vector<64x128xf32>
    %6 = arith.addf %3, %5 : vector<64x128xf32>
    %c0_6 = arith.constant 0 : index
    %c0_7 = arith.constant 0 : index
    %c0_8 = arith.constant 0 : index
    %7 = vector.load %arg5[%c0_6, %c0_7, %c0_8] : memref<1x64x128xf32, #tpu.memory_space<vmem>>, vector<1x64x128xf32>
    %8 = vector.shape_cast %7 : vector<1x64x128xf32> to vector<64x128xf32>
    %9 = vector.shape_cast %6 : vector<64x128xf32> to vector<1x64x128xf32>
    tpu.vector_store %arg5[%c0_6, %c0_7, %c0_8], %9 {strides = array<i32>} : memref<1x64x128xf32, #tpu.memory_space<vmem>>, vector<1x64x128xf32>,
    return
  }
  func.func @transform_0(%arg0: i32, %arg1: i32) -> (i32, i32, i32) {
    %c0_i32 = arith.constant 0 : i32
    %c0_i32_0 = arith.constant 0 : i32
    return %arg0, %c0_i32, %arg1 : i32, i32, i32
  }
  func.func @transform_1(%arg0: i32, %arg1: i32) -> (i32, i32) {
    %c0_i32 = arith.constant 0 : i32
    %c0_i32_0 = arith.constant 0 : i32
    %c0_i32_1 = arith.constant 0 : i32
    return %c0_i32, %c0_i32_0 : i32, i32
  }
  func.func @transform_2(%arg0: i32, %arg1: i32) -> (i32, i32) {
    %c0_i32 = arith.constant 0 : i32
    %c0_i32_0 = arith.constant 0 : i32
    %c0_i32_1 = arith.constant 0 : i32
    return %c0_i32, %c0_i32_0 : i32, i32
  }
  func.func @transform_3(%arg0: i32, %arg1: i32) -> (i32, i32, i32) {
    %c0_i32 = arith.constant 0 : i32
    %c0_i32_0 = arith.constant 0 : i32
    return %arg0, %c0_i32, %arg1 : i32, i32, i32
  }
}

module attributes {stable_mosaic.version = 11 : i64} {
  func.func @kernel(%arg0: i32, %arg1: i32, %arg2: memref<1x8x384xbf16, #tpu.memory_space<vmem>>, %arg3: memref<1x8x128xbf16, #tpu.memory_space<vmem>>, %arg4: memref<9x8x8xbf16, #tpu.memory_space<vmem>>, %arg5: memref<8x1xf32, #tpu.memory_space<vmem>>, %arg6: memref<1x8x384xf32, #tpu.memory_space<vmem>>, %arg7: memref<8x512xbf16, #tpu.memory_space<vmem>>) attributes {dimension_semantics = [#tpu.dimension_semantics<parallel>, #tpu.dimension_semantics<parallel>], iteration_bounds = array<i64: 4, 1>, scalar_prefetch = 0 : i64, scratch_operands = 1 : i64, tpu.core_type = #tpu.core_type<tc>, window_params = [{transform_indices = @transform_0, window_bounds = array<i64: 1, 8, 384>}, {transform_indices = @transform_1, window_bounds = array<i64: 1, 8, 128>}, {pipeline_mode = #tpu.pipeline_mode<synchronous>, transform_indices = @transform_2, window_bounds = array<i64: 9, 8, 8>}, {pipeline_mode = #tpu.pipeline_mode<synchronous>, transform_indices = @transform_3, window_bounds = array<i64: 8, 1>}, {transform_indices = @transform_4, window_bounds = array<i64: 1, 8, 384>}]} {
    %c0 = arith.constant 0 : index
    %c0_0 = arith.constant 0 : index
    %c0_1 = arith.constant 0 : index
    %0 = vector.load %arg2[%c0, %c0_0, %c0_1] : memref<1x8x384xbf16, #tpu.memory_space<vmem>>, vector<1x8x384xbf16>
    %1 = vector.shape_cast %0 : vector<1x8x384xbf16> to vector<8x384xbf16>
    %c0_2 = arith.constant 0 : index
    %c0_3 = arith.constant 0 : index
    %2 = vector.load %arg7[%c0_2, %c0_3] : memref<8x512xbf16, #tpu.memory_space<vmem>>, vector<8x384xbf16>
    tpu.vector_store %arg7[%c0_2, %c0_3], %1 {strides = array<i32>} : memref<8x512xbf16, #tpu.memory_space<vmem>>, vector<8x384xbf16>,
    %c0_4 = arith.constant 0 : index
    %c0_5 = arith.constant 0 : index
    %c0_6 = arith.constant 0 : index
    %3 = vector.load %arg3[%c0_4, %c0_5, %c0_6] : memref<1x8x128xbf16, #tpu.memory_space<vmem>>, vector<1x8x128xbf16>
    %4 = vector.shape_cast %3 : vector<1x8x128xbf16> to vector<8x128xbf16>
    %c0_7 = arith.constant 0 : index
    %c384 = arith.constant 384 : index
    %5 = vector.load %arg7[%c0_7, %c384] : memref<8x512xbf16, #tpu.memory_space<vmem>>, vector<8x128xbf16>
    tpu.vector_store %arg7[%c0_7, %c384], %4 {strides = array<i32>} : memref<8x512xbf16, #tpu.memory_space<vmem>>, vector<8x128xbf16>,
    %c0_8 = arith.constant 0 : index
    %c0_9 = arith.constant 0 : index
    %6 = vector.load %arg7[%c0_8, %c0_9] : memref<8x512xbf16, #tpu.memory_space<vmem>>, vector<8x512xbf16>
    %cst = arith.constant 0.000000e+00 : f32
    %7 = vector.broadcast %cst : f32 to vector<8x384xf32>
    %c0_10 = arith.constant 0 : index
    %c0_11 = arith.constant 0 : index
    %c0_12 = arith.constant 0 : index
    %8 = vector.load %arg4[%c0_10, %c0_11, %c0_12] : memref<9x8x8xbf16, #tpu.memory_space<vmem>>, vector<1x8x8xbf16>
    %9 = vector.shape_cast %8 : vector<1x8x8xbf16> to vector<8x8xbf16>
    %10 = vector.extract_strided_slice %6 {offsets = [0, 0], sizes = [8, 384], strides = [1, 1]} : vector<8x512xbf16> to vector<8x384xbf16>
    %cst_13 = arith.constant dense<0.000000e+00> : vector<8x384xf32>
    %11 = tpu.matmul %9, %10, %cst_13 {dimension_numbers = #tpu.dot_dimension_numbers<[1], [0], [0], [1], [0, 0, 1, 1], [], []>} : vector<8x8xbf16>, vector<8x384xbf16>, vector<8x384xf32> -> vector<8x384xf32>
    %12 = arith.addf %7, %11 : vector<8x384xf32>
    %c1 = arith.constant 1 : index
    %c0_14 = arith.constant 0 : index
    %c0_15 = arith.constant 0 : index
    %13 = vector.load %arg4[%c1, %c0_14, %c0_15] : memref<9x8x8xbf16, #tpu.memory_space<vmem>>, vector<1x8x8xbf16>
    %14 = vector.shape_cast %13 : vector<1x8x8xbf16> to vector<8x8xbf16>
    %15 = vector.extract_strided_slice %6 {offsets = [0, 1], sizes = [8, 384], strides = [1, 1]} : vector<8x512xbf16> to vector<8x384xbf16>
    %cst_16 = arith.constant dense<0.000000e+00> : vector<8x384xf32>
    %16 = tpu.matmul %14, %15, %cst_16 {dimension_numbers = #tpu.dot_dimension_numbers<[1], [0], [0], [1], [0, 0, 1, 1], [], []>} : vector<8x8xbf16>, vector<8x384xbf16>, vector<8x384xf32> -> vector<8x384xf32>
    %17 = arith.addf %12, %16 : vector<8x384xf32>
    %c2 = arith.constant 2 : index
    %c0_17 = arith.constant 0 : index
    %c0_18 = arith.constant 0 : index
    %18 = vector.load %arg4[%c2, %c0_17, %c0_18] : memref<9x8x8xbf16, #tpu.memory_space<vmem>>, vector<1x8x8xbf16>
    %19 = vector.shape_cast %18 : vector<1x8x8xbf16> to vector<8x8xbf16>
    %20 = vector.extract_strided_slice %6 {offsets = [0, 2], sizes = [8, 384], strides = [1, 1]} : vector<8x512xbf16> to vector<8x384xbf16>
    %cst_19 = arith.constant dense<0.000000e+00> : vector<8x384xf32>
    %21 = tpu.matmul %19, %20, %cst_19 {dimension_numbers = #tpu.dot_dimension_numbers<[1], [0], [0], [1], [0, 0, 1, 1], [], []>} : vector<8x8xbf16>, vector<8x384xbf16>, vector<8x384xf32> -> vector<8x384xf32>
    %22 = arith.addf %17, %21 : vector<8x384xf32>
    %c3 = arith.constant 3 : index
    %c0_20 = arith.constant 0 : index
    %c0_21 = arith.constant 0 : index
    %23 = vector.load %arg4[%c3, %c0_20, %c0_21] : memref<9x8x8xbf16, #tpu.memory_space<vmem>>, vector<1x8x8xbf16>
    %24 = vector.shape_cast %23 : vector<1x8x8xbf16> to vector<8x8xbf16>
    %25 = vector.extract_strided_slice %6 {offsets = [0, 18], sizes = [8, 384], strides = [1, 1]} : vector<8x512xbf16> to vector<8x384xbf16>
    %cst_22 = arith.constant dense<0.000000e+00> : vector<8x384xf32>
    %26 = tpu.matmul %24, %25, %cst_22 {dimension_numbers = #tpu.dot_dimension_numbers<[1], [0], [0], [1], [0, 0, 1, 1], [], []>} : vector<8x8xbf16>, vector<8x384xbf16>, vector<8x384xf32> -> vector<8x384xf32>
    %27 = arith.addf %22, %26 : vector<8x384xf32>
    %c4 = arith.constant 4 : index
    %c0_23 = arith.constant 0 : index
    %c0_24 = arith.constant 0 : index
    %28 = vector.load %arg4[%c4, %c0_23, %c0_24] : memref<9x8x8xbf16, #tpu.memory_space<vmem>>, vector<1x8x8xbf16>
    %29 = vector.shape_cast %28 : vector<1x8x8xbf16> to vector<8x8xbf16>
    %30 = vector.extract_strided_slice %6 {offsets = [0, 19], sizes = [8, 384], strides = [1, 1]} : vector<8x512xbf16> to vector<8x384xbf16>
    %cst_25 = arith.constant dense<0.000000e+00> : vector<8x384xf32>
    %31 = tpu.matmul %29, %30, %cst_25 {dimension_numbers = #tpu.dot_dimension_numbers<[1], [0], [0], [1], [0, 0, 1, 1], [], []>} : vector<8x8xbf16>, vector<8x384xbf16>, vector<8x384xf32> -> vector<8x384xf32>
    %32 = arith.addf %27, %31 : vector<8x384xf32>
    %c5 = arith.constant 5 : index
    %c0_26 = arith.constant 0 : index
    %c0_27 = arith.constant 0 : index
    %33 = vector.load %arg4[%c5, %c0_26, %c0_27] : memref<9x8x8xbf16, #tpu.memory_space<vmem>>, vector<1x8x8xbf16>
    %34 = vector.shape_cast %33 : vector<1x8x8xbf16> to vector<8x8xbf16>
    %35 = vector.extract_strided_slice %6 {offsets = [0, 20], sizes = [8, 384], strides = [1, 1]} : vector<8x512xbf16> to vector<8x384xbf16>
    %cst_28 = arith.constant dense<0.000000e+00> : vector<8x384xf32>
    %36 = tpu.matmul %34, %35, %cst_28 {dimension_numbers = #tpu.dot_dimension_numbers<[1], [0], [0], [1], [0, 0, 1, 1], [], []>} : vector<8x8xbf16>, vector<8x384xbf16>, vector<8x384xf32> -> vector<8x384xf32>
    %37 = arith.addf %32, %36 : vector<8x384xf32>
    %c6 = arith.constant 6 : index
    %c0_29 = arith.constant 0 : index
    %c0_30 = arith.constant 0 : index
    %38 = vector.load %arg4[%c6, %c0_29, %c0_30] : memref<9x8x8xbf16, #tpu.memory_space<vmem>>, vector<1x8x8xbf16>
    %39 = vector.shape_cast %38 : vector<1x8x8xbf16> to vector<8x8xbf16>
    %40 = vector.extract_strided_slice %6 {offsets = [0, 36], sizes = [8, 384], strides = [1, 1]} : vector<8x512xbf16> to vector<8x384xbf16>
    %cst_31 = arith.constant dense<0.000000e+00> : vector<8x384xf32>
    %41 = tpu.matmul %39, %40, %cst_31 {dimension_numbers = #tpu.dot_dimension_numbers<[1], [0], [0], [1], [0, 0, 1, 1], [], []>} : vector<8x8xbf16>, vector<8x384xbf16>, vector<8x384xf32> -> vector<8x384xf32>
    %42 = arith.addf %37, %41 : vector<8x384xf32>
    %c7 = arith.constant 7 : index
    %c0_32 = arith.constant 0 : index
    %c0_33 = arith.constant 0 : index
    %43 = vector.load %arg4[%c7, %c0_32, %c0_33] : memref<9x8x8xbf16, #tpu.memory_space<vmem>>, vector<1x8x8xbf16>
    %44 = vector.shape_cast %43 : vector<1x8x8xbf16> to vector<8x8xbf16>
    %45 = vector.extract_strided_slice %6 {offsets = [0, 37], sizes = [8, 384], strides = [1, 1]} : vector<8x512xbf16> to vector<8x384xbf16>
    %cst_34 = arith.constant dense<0.000000e+00> : vector<8x384xf32>
    %46 = tpu.matmul %44, %45, %cst_34 {dimension_numbers = #tpu.dot_dimension_numbers<[1], [0], [0], [1], [0, 0, 1, 1], [], []>} : vector<8x8xbf16>, vector<8x384xbf16>, vector<8x384xf32> -> vector<8x384xf32>
    %47 = arith.addf %42, %46 : vector<8x384xf32>
    %c8 = arith.constant 8 : index
    %c0_35 = arith.constant 0 : index
    %c0_36 = arith.constant 0 : index
    %48 = vector.load %arg4[%c8, %c0_35, %c0_36] : memref<9x8x8xbf16, #tpu.memory_space<vmem>>, vector<1x8x8xbf16>
    %49 = vector.shape_cast %48 : vector<1x8x8xbf16> to vector<8x8xbf16>
    %50 = vector.extract_strided_slice %6 {offsets = [0, 38], sizes = [8, 384], strides = [1, 1]} : vector<8x512xbf16> to vector<8x384xbf16>
    %cst_37 = arith.constant dense<0.000000e+00> : vector<8x384xf32>
    %51 = tpu.matmul %49, %50, %cst_37 {dimension_numbers = #tpu.dot_dimension_numbers<[1], [0], [0], [1], [0, 0, 1, 1], [], []>} : vector<8x8xbf16>, vector<8x384xbf16>, vector<8x384xf32> -> vector<8x384xf32>
    %52 = arith.addf %47, %51 : vector<8x384xf32>
    %c0_38 = arith.constant 0 : index
    %c0_39 = arith.constant 0 : index
    %53 = vector.load %arg5[%c0_38, %c0_39] : memref<8x1xf32, #tpu.memory_space<vmem>>, vector<8x1xf32>
    %54 = vector.broadcast %53 : vector<8x1xf32> to vector<8x384xf32>
    %55 = arith.addf %52, %54 : vector<8x384xf32>
    %c0_40 = arith.constant 0 : index
    %c0_41 = arith.constant 0 : index
    %c0_42 = arith.constant 0 : index
    %56 = vector.load %arg6[%c0_40, %c0_41, %c0_42] : memref<1x8x384xf32, #tpu.memory_space<vmem>>, vector<1x8x384xf32>
    %57 = vector.shape_cast %56 : vector<1x8x384xf32> to vector<8x384xf32>
    %58 = vector.shape_cast %55 : vector<8x384xf32> to vector<1x8x384xf32>
    tpu.vector_store %arg6[%c0_40, %c0_41, %c0_42], %58 {strides = array<i32>} : memref<1x8x384xf32, #tpu.memory_space<vmem>>, vector<1x8x384xf32>,
    return
  }
  func.func @transform_0(%arg0: i32, %arg1: i32) -> (i32, i32, i32) {
    %c0_i32 = arith.constant 0 : i32
    %c0_i32_0 = arith.constant 0 : i32
    return %arg0, %c0_i32, %arg1 : i32, i32, i32
  }
  func.func @transform_1(%arg0: i32, %arg1: i32) -> (i32, i32, i32) {
    %c1_i32 = arith.constant 1 : i32
    %0 = arith.addi %arg1, %c1_i32 : i32
    %c3_i32 = arith.constant 3 : i32
    %1 = arith.muli %0, %c3_i32 : i32
    %c0_i32 = arith.constant 0 : i32
    %c0_i32_0 = arith.constant 0 : i32
    return %arg0, %c0_i32, %1 : i32, i32, i32
  }
  func.func @transform_2(%arg0: i32, %arg1: i32) -> (i32, i32, i32) {
    %c0_i32 = arith.constant 0 : i32
    %c0_i32_0 = arith.constant 0 : i32
    %c0_i32_1 = arith.constant 0 : i32
    %c0_i32_2 = arith.constant 0 : i32
    return %c0_i32, %c0_i32_0, %c0_i32_1 : i32, i32, i32
  }
  func.func @transform_3(%arg0: i32, %arg1: i32) -> (i32, i32) {
    %c0_i32 = arith.constant 0 : i32
    %c0_i32_0 = arith.constant 0 : i32
    %c0_i32_1 = arith.constant 0 : i32
    return %c0_i32, %c0_i32_0 : i32, i32
  }
  func.func @transform_4(%arg0: i32, %arg1: i32) -> (i32, i32, i32) {
    %c0_i32 = arith.constant 0 : i32
    %c0_i32_0 = arith.constant 0 : i32
    return %arg0, %c0_i32, %arg1 : i32, i32, i32
  }
}

</mosaic_0001>

<llo_original>
// kernel: soft_comp_forward.2
$region0: #{soft_comp_forward.2}
  #allocation0 [shape = 'u32[]', space=smem, size = 0x4, offset = 0x4, fixed_abs, tag = 'smem constant byte address 0x4 - core index']
  #allocation1 [shape = 'u32[144,128]{1,0:T(1,128)}', space=vmem, size = 0x12000, scoped, tag = 'internal scratch']
  %s0 = inlined_call_operand.vmem [shape: bf16[4,32,128], index: 0, kind: input, shape index: {}]
  %s1 = inlined_call_operand.vmem [shape: bf16[64,32], index: 1, kind: input, shape index: {}]
  %s2 = inlined_call_operand.vmem [shape: f32[64,1], index: 2, kind: input, shape index: {}]
  %s3 = inlined_call_operand.vmem [shape: f32[4,64,128], index: 3, kind: output, shape index: {}]
  %s4 = sld [smem:[#allocation0]]
  $region45: #{soft_comp_forward.2} parent=0
    _
  %s6 = ssub.s32 1, %s4
  %s7 = scalar_select 0, %s6, %s4
  loop: start=0, step=1, limit=6
  $region2: #{soft_comp_forward.2} parent=0 // loop_pre_header
    _
  $region3: #{soft_comp_forward.2} parent=0 // loop_header
    %s9 = sphi 0, %s13
    %p10 = scmp.ge.s32.totalorder %s9, 6
    %s16 = sphi 0, %s28
    %s17 = sphi 0, %s24
    %s18 = sphi 0, %s16
    %s19 = sphi 0, %s17
    %s20 = sphi 0, %s18
    %s21 = sphi 0, %s19
    %s33 = sphi 0, %s35
    %s36 = sphi 0, %s33
    %s37 = sphi 0, %s36
    %s53 = sphi 0, %s37
    %s57 = sphi 0, %s57
    %s59 = sphi 0, %s57
    %s60 = sphi 0, %s59
    %s74 = sphi 0, %s60
    %s78 = sphi 0, %s78
    %s80 = sphi 0, %s78
    %s81 = sphi 0, %s80
    %s95 = sphi 0, %s81
    %s103 = sphi 0, %s105
    %s106 = sphi 0, %s103
    %s107 = sphi 0, %s106
    %s123 = sphi 0, %s107
  $region4: #{soft_comp_forward.2} parent=0 // loop_header_branch
    %12 = sbr.rel (%p10) target = $region8
  $region5: #{soft_comp_forward.2} parent=0 // loop_body
    %s14 = ssub.s32 %s9, 1
    %s15 = ssub.s32 %s9, 2
    %s22 = sadd.s32 1, %s17
    %p23 = scmp.ge.s32.totalorder %s22, 1
    %s24 = scalar_select %p23, 0, %s22
    %s25 = sadd.s32 1, %s16
    %s26 = scalar_select %p23, %s25, %s16
    %p27 = scmp.ge.s32.totalorder %s26, 4
    %s28 = scalar_select %p27, 0, %s26
    %s29 = ssub.s32 %s16, %s28
    %s30 = ssub.s32 %s17, %s24
    %s31 = sor.u32 %s29, %s30
    %p32 = scmp.eq.s32.totalorder %s31, 0
    %s34 = sadd.s32 %s33, 1
    %s35 = scalar_select %p32, %s33, %s34
    %p38 = pneg %p32
    %p39 = scmp.eq.s32.totalorder %s9, 3
    %p40 = por %p38, %p39
    %p41 = scmp.ne.s32.totalorder %s33, %s36
    %p42 = scmp.eq.s32.totalorder %s9, 0
    %p43 = por %p41, %p42
    %p44 = scmp.ne.s32.totalorder %s33, %s36
    %p45 = scmp.eq.s32.totalorder %s14, 3
    %p46 = por %p44, %p45
    %p47 = scmp.ne.s32.totalorder %s36, %s37
    %p48 = scmp.eq.s32.totalorder %s14, 0
    %p49 = por %p47, %p48
    %p50 = scmp.ne.s32.totalorder %s36, %s37
    %p51 = scmp.eq.s32.totalorder %s15, 3
    %p52 = por %p50, %p51
    %p54 = scmp.ne.s32.totalorder %s37, %s53
    %p55 = scmp.eq.s32.totalorder %s15, 0
    %p56 = por %p54, %p55
    %s58 = sadd.s32 %s57, 1
    %p61 = scmp.eq.s32.totalorder %s9, 3
    %p62 = scmp.ne.s32.totalorder %s57, %s59
    %p63 = scmp.eq.s32.totalorder %s9, 0
    %p64 = por %p62, %p63
    %p65 = scmp.ne.s32.totalorder %s57, %s59
    %p66 = scmp.eq.s32.totalorder %s14, 3
    %p67 = por %p65, %p66
    %p68 = scmp.ne.s32.totalorder %s59, %s60
    %p69 = scmp.eq.s32.totalorder %s14, 0
    %p70 = por %p68, %p69
    %p71 = scmp.ne.s32.totalorder %s59, %s60
    %p72 = scmp.eq.s32.totalorder %s15, 3
    %p73 = por %p71, %p72
    %p75 = scmp.ne.s32.totalorder %s60, %s74
    %p76 = scmp.eq.s32.totalorder %s15, 0
    %p77 = por %p75, %p76
    %s79 = sadd.s32 %s78, 1
    %p82 = scmp.eq.s32.totalorder %s9, 3
    %p83 = scmp.ne.s32.totalorder %s78, %s80
    %p84 = scmp.eq.s32.totalorder %s9, 0
    %p85 = por %p83, %p84
    %p86 = scmp.ne.s32.totalorder %s78, %s80
    %p87 = scmp.eq.s32.totalorder %s14, 3
    %p88 = por %p86, %p87
    %p89 = scmp.ne.s32.totalorder %s80, %s81
    %p90 = scmp.eq.s32.totalorder %s14, 0
    %p91 = por %p89, %p90
    %p92 = scmp.ne.s32.totalorder %s80, %s81
    %p93 = scmp.eq.s32.totalorder %s15, 3
    %p94 = por %p92, %p93
    %p96 = scmp.ne.s32.totalorder %s81, %s95
    %p97 = scmp.eq.s32.totalorder %s15, 0
    %p98 = por %p96, %p97
    %s99 = ssub.s32 %s16, %s28
    %s100 = ssub.s32 %s17, %s24
    %s101 = sor.u32 %s99, %s100
    %p102 = scmp.eq.s32.totalorder %s101, 0
    %s104 = sadd.s32 %s103, 1
    %s105 = scalar_select %p102, %s103, %s104
    %p108 = pneg %p102
    %p109 = scmp.eq.s32.totalorder %s9, 3
    %p110 = por %p108, %p109
    %p111 = scmp.ne.s32.totalorder %s103, %s106
    %p112 = scmp.eq.s32.totalorder %s9, 0
    %p113 = por %p111, %p112
    %p114 = scmp.ne.s32.totalorder %s103, %s106
    %p115 = scmp.eq.s32.totalorder %s14, 3
    %p116 = por %p114, %p115
    %p117 = scmp.ne.s32.totalorder %s106, %s107
    %p118 = scmp.eq.s32.totalorder %s14, 0
    %p119 = por %p117, %p118
    %p120 = scmp.ne.s32.totalorder %s106, %s107
    %p121 = scmp.eq.s32.totalorder %s15, 3
    %p122 = por %p120, %p121
    %p124 = scmp.ne.s32.totalorder %s107, %s123
    %p125 = scmp.eq.s32.totalorder %s15, 0
    %p126 = por %p124, %p125
    %p127 = scmp.le.s32.totalorder 1, %s9
    %p128 = scmp.lt.s32.totalorder %s9, 5
    %p129 = pnand %p127, %p128
    %p130 = pneg %p129
    // Predicated region
    $region9: #{soft_comp_forward.2} parent=5 // pred_check
      _
    $region10: #{soft_comp_forward.2} parent=5 // pred_check_branch
      %132 = sbr.rel (%p129) target = $region12
    $region11: #{soft_comp_forward.2} parent=5 // pred_region
      %s133 = ssub.s32 %s9, 1
      // Predicated region
      $region13: #{soft_comp_forward.2} parent=11 // pred_check
        %p134 = pneg %p70
      $region14: #{soft_comp_forward.2} parent=11 // pred_check_branch
        %136 = sbr.rel (%p134) target = $region16
      $region15: #{soft_comp_forward.2} parent=11 // pred_region
        _
      $region16: #{soft_comp_forward.2} parent=11 // pred_fallthru
        _
      // Predicated region
      $region17: #{soft_comp_forward.2} parent=11 // pred_check
        %p137 = pneg %p91
      $region18: #{soft_comp_forward.2} parent=11 // pred_check_branch
        %139 = sbr.rel (%p137) target = $region20
      $region19: #{soft_comp_forward.2} parent=11 // pred_region
        _
      $region20: #{soft_comp_forward.2} parent=11 // pred_fallthru
        _
    $region12: #{soft_comp_forward.2} parent=5 // pred_fallthru
      _
    %p140 = scmp.lt.s32.totalorder %s9, 4
    // Predicated region
    $region21: #{soft_comp_forward.2} parent=5 // pred_check
      %p141 = pneg %p140
    $region22: #{soft_comp_forward.2} parent=5 // pred_check_branch
      %143 = sbr.rel (%p141) target = $region24
    $region23: #{soft_comp_forward.2} parent=5 // pred_region
      // Predicated region
      $region25: #{soft_comp_forward.2} parent=23 // pred_check
        %p144 = pneg %p43
      $region26: #{soft_comp_forward.2} parent=23 // pred_check_branch
        %146 = sbr.rel (%p144) target = $region28
      $region27: #{soft_comp_forward.2} parent=23 // pred_region
        %p147 = scmp.lt.s32.totalorder %s16, 3
        %s148 = scalar_select %p147, %s16, 3
        %p149 = scmp.lt.s32.totalorder %s17, 0
        %s150 = scalar_select %p149, %s17, 0
        %s151 = smul.addr %s148, 4
        %s152 = sadd.s32 %s150, %s151
        %s153 = smul.addr %s152, 4
        %s154 = scalar_lea.vmem %s0, %s153
      $region28: #{soft_comp_forward.2} parent=23 // pred_fallthru
        _
    $region24: #{soft_comp_forward.2} parent=5 // pred_fallthru
      _
    %p155 = scmp.le.s32.totalorder 1, %s9
    %p156 = scmp.lt.s32.totalorder %s9, 5
    %p157 = pnand %p155, %p156
    %p158 = pneg %p157
    // Predicated region
    $region29: #{soft_comp_forward.2} parent=5 // pred_check
      _
    $region30: #{soft_comp_forward.2} parent=5 // pred_check_branch
      %160 = sbr.rel (%p157) target = $region32
    $region31: #{soft_comp_forward.2} parent=5 // pred_region
      %s161 = ssub.s32 %s9, 1
      %p162 = scmp.lt.s32.totalorder %s18, 3
      %s163 = scalar_select %p162, %s18, 3
      %p164 = scmp.lt.s32.totalorder %s19, 0
      %s165 = scalar_select %p164, %s19, 0
      %s166 = smul.addr %s163, 4
      %s167 = sadd.s32 %s165, %s166
      %s168 = smul.addr %s167, 4
      %s169 = scalar_lea.vmem %s0, %s168
      %p170 = pneg %p49
      %p171 = pneg %p46
      %p172 = pneg %p70
      %p173 = pneg %p67
      %p174 = pneg %p91
      %p175 = pneg %p88
      %p176 = pneg %p119
      %p177 = pneg %p116
      %p178 = scmp.lt.s32.totalorder %s18, 3
      %s179 = scalar_select %p178, %s18, 3
      %p180 = scmp.lt.s32.totalorder %s19, 0
      %s181 = scalar_select %p180, %s19, 0
      %s182 = smul.addr %s179, 8
      %s183 = sadd.s32 %s181, %s182
      %s184 = smul.addr %s183, 8
      %s185 = scalar_lea.vmem %s3, %s184
      %p186 = scmp.lt.s32.totalorder %s18, 3
      %s187 = scalar_select %p186, %s18, 3
      %p188 = scmp.lt.s32.totalorder %s19, 0
      %s189 = scalar_select %p188, %s19, 0
      %s190 = smul.addr %s187, 4
      %s191 = sadd.s32 %s189, %s190
      %s192 = smul.addr %s191, 4
      %s193 = scalar_lea.vmem %s0, %s192
      %p194 = scmp.lt.s32.totalorder %s18, 3
      %s195 = scalar_select %p194, %s18, 3
      %p196 = scmp.lt.s32.totalorder %s19, 0
      %s197 = scalar_select %p196, %s19, 0
      %s198 = smul.addr %s195, 8
      %s199 = sadd.s32 %s197, %s198
      %s200 = smul.addr %s199, 8
      %s201 = scalar_lea.vmem %s3, %s200
      %v203 = vld [vmem:[%s1] sm:$0xf]
      %v204 = vld [vmem:[%s1 + $0x4] sm:$0xf]
      %v205 = vld [vmem:[%s1 + $0x8] sm:$0xf]
      %v206 = vld [vmem:[%s1 + $0xc] sm:$0xf]
      %v207 = vld [vmem:[%s1 + $0x10] sm:$0xf]
      %v208 = vld [vmem:[%s1 + $0x14] sm:$0xf]
      %v209 = vld [vmem:[%s1 + $0x18] sm:$0xf]
      %v210 = vld [vmem:[%s1 + $0x1c] sm:$0xf]
      %v211 = vld [vmem:[%s193] sm:$0xf]
      %v212 = vld [vmem:[%s193 + $0x4] sm:$0xf]
      %v213 = vld [vmem:[%s193 + $0x8] sm:$0xf]
      %v214 = vld [vmem:[%s193 + $0xc] sm:$0xf]
      %v215 = vld [vmem:[%s2] sm:$0xff]
      %v216 = vld [vmem:[%s2 + $0x8] sm:$0xff]
      %v217 = vld [vmem:[%s2 + $0x10] sm:$0xff]
      %v218 = vld [vmem:[%s2 + $0x18] sm:$0xff]
      %v219 = vld [vmem:[%s2 + $0x20] sm:$0xff]
      %v220 = vld [vmem:[%s2 + $0x28] sm:$0xff]
      %v221 = vld [vmem:[%s2 + $0x30] sm:$0xff]
      %v222 = vld [vmem:[%s2 + $0x38] sm:$0xff]
      %224 = vset.pattern.permute.xlu0 0
      %225 = vperm.xlu0 %224, %v215
      %v226 = vpop.permute.xlu0 %225
      %229 = vset.pattern.permute.xlu0 0
      %230 = vperm.xlu0 %229, %v216
      %v231 = vpop.permute.xlu0 %230
      %234 = vset.pattern.permute.xlu0 0
      %235 = vperm.xlu0 %234, %v217
      %v236 = vpop.permute.xlu0 %235
      %239 = vset.pattern.permute.xlu0 0
      %240 = vperm.xlu0 %239, %v218
      %v241 = vpop.permute.xlu0 %240
      %244 = vset.pattern.permute.xlu0 0
      %245 = vperm.xlu0 %244, %v219
      %v246 = vpop.permute.xlu0 %245
      %249 = vset.pattern.permute.xlu0 0
      %250 = vperm.xlu0 %249, %v220
      %v251 = vpop.permute.xlu0 %250
      %254 = vset.pattern.permute.xlu0 0
      %255 = vperm.xlu0 %254, %v221
      %v256 = vpop.permute.xlu0 %255
      %259 = vset.pattern.permute.xlu0 0
      %260 = vperm.xlu0 %259, %v222
      %v261 = vpop.permute.xlu0 %260
      %v271 = vunpack.c.l.b16 %v203
      %v272 = vunpack.c.l.b16 %v204
      %v273 = vunpack.c.l.b16 %v205
      %v274 = vunpack.c.l.b16 %v206
      %v275 = vunpack.c.l.b16 %v207
      %v276 = vunpack.c.l.b16 %v208
      %v277 = vunpack.c.l.b16 %v209
      %v278 = vunpack.c.l.b16 %v210
      %v279 = vpack.c.b16 %v272, %v271
      %v280 = vpack.c.b16 %v274, %v273
      %v281 = vpack.c.b16 %v276, %v275
      %v282 = vpack.c.b16 %v278, %v277
      %v287 = vunpack.c.l.b16 %v211
      %v288 = vunpack.c.l.b16 %v212
      %v289 = vunpack.c.l.b16 %v213
      %v290 = vunpack.c.l.b16 %v214
      %v291 = vpack.c.b16 %v288, %v287
      %v292 = vpack.c.b16 %v290, %v289
      %vm295 = vcmask 261120
      %v297 = vsel %vm295, %v279, 0
      %v300 = vsel %vm295, %v280, 0
      %v303 = vsel %vm295, %v281, 0
      %v306 = vsel %vm295, %v282, 0
      %308 = vmatprep.subr.bf16.mxu0 0
      %309 = vmatpush1.bf16.msra.mxu0 %v291
      %310 = vmatprep.subr.bf16.mxu0 0
      %311 = vmatpush1.bf16.msra.mxu0 %v292
      %312 = vmatprep.subr.bf16.mxu0 0
      %313 = vmatpush1.bf16.msra.mxu0 0
      %314 = vmatprep.subr.bf16.mxu0 0
      %315 = vmatpush1.bf16.msra.mxu0 0
      %316 = vmatprep.subr.bf16.mxu0 0
      %317 = vmatpush1.bf16.msra.mxu0 0
      %318 = vmatprep.subr.bf16.mxu0 0
      %319 = vmatpush1.bf16.msra.mxu0 0
      %320 = vmatprep.subr.bf16.mxu0 0
      %321 = vmatpush1.bf16.msra.mxu0 0
      %322 = vmatprep.subr.bf16.mxu0 0
      %323 = vmatpush1.bf16.msra.mxu0 0
      %324 = vmatprep.subr.bf16.mxu0 0
      %325 = vmatpush1.bf16.msra.mxu0 0
      %326 = vmatprep.subr.bf16.mxu0 0
      %327 = vmatpush1.bf16.msra.mxu0 0
      %328 = vmatprep.subr.bf16.mxu0 0
      %329 = vmatpush1.bf16.msra.mxu0 0
      %330 = vmatprep.subr.bf16.mxu0 0
      %331 = vmatpush1.bf16.msra.mxu0 0
      %332 = vmatprep.subr.bf16.mxu0 0
      %333 = vmatpush1.bf16.msra.mxu0 0
      %334 = vmatprep.subr.bf16.mxu0 0
      %335 = vmatpush1.bf16.msra.mxu0 0
      %336 = vmatprep.subr.bf16.mxu0 0
      %337 = vmatpush1.bf16.msra.mxu0 0
      %338 = vmatprep.subr.bf16.mxu0 0
      %339 = vmatpush1.bf16.msra.mxu0 0
      %340 = vmatprep.mubr.bf16.mxu0 0
      %341 = vmatmul.mubr.bf16.gmra.mrb[0].mxu0 %v297
      %v342 = vpop.f32.mrb[0].mxu0
      %v343 = vadd.f32 %v226, %v342
      %v344 = vpop.f32.mrb[0].mxu0
      %v345 = vpop.f32.mrb[0].mxu0
      %v346 = vadd.f32 %v231, %v345
      %v347 = vpop.f32.mrb[0].mxu0
      %348 = vmatprep.mubr.bf16.mxu0 0
      %349 = vmatmul.mubr.bf16.gmra.mrb[0].mxu0 %v300
      %v350 = vpop.f32.mrb[0].mxu0
      %v351 = vadd.f32 %v236, %v350
      %v352 = vpop.f32.mrb[0].mxu0
      %v353 = vpop.f32.mrb[0].mxu0
      %v354 = vadd.f32 %v241, %v353
      %v355 = vpop.f32.mrb[0].mxu0
      %356 = vmatprep.mubr.bf16.mxu0 0
      %357 = vmatmul.mubr.bf16.gmra.mrb[0].mxu0 %v303
      %v358 = vpop.f32.mrb[0].mxu0
      %v359 = vadd.f32 %v246, %v358
      %v360 = vpop.f32.mrb[0].mxu0
      %v361 = vpop.f32.mrb[0].mxu0
      %v362 = vadd.f32 %v251, %v361
      %v363 = vpop.f32.mrb[0].mxu0
      %364 = vmatprep.mubr.bf16.mxu0 0
      %365 = vmatmul.mubr.bf16.gmra.mrb[0].mxu0 %v306
      %v366 = vpop.f32.mrb[0].mxu0
      %v367 = vadd.f32 %v256, %v366
      %v368 = vpop.f32.mrb[0].mxu0
      %v369 = vpop.f32.mrb[0].mxu0
      %v370 = vadd.f32 %v261, %v369
      %v371 = vpop.f32.mrb[0].mxu0
      %372 = vdwg.mxu0
      %373 = vst [vmem:[%s201] sm:$0xff] %v343
      %374 = vst [vmem:[%s201 + $0x8] sm:$0xff] %v346
      %375 = vst [vmem:[%s201 + $0x10] sm:$0xff] %v351
      %376 = vst [vmem:[%s201 + $0x18] sm:$0xff] %v354
      %377 = vst [vmem:[%s201 + $0x20] sm:$0xff] %v359
      %378 = vst [vmem:[%s201 + $0x28] sm:$0xff] %v362
      %379 = vst [vmem:[%s201 + $0x30] sm:$0xff] %v367
      %380 = vst [vmem:[%s201 + $0x38] sm:$0xff] %v370
      %p381 = scmp.lt.s32.totalorder %s18, 3
      %s382 = scalar_select %p381, %s18, 3
      %p383 = scmp.lt.s32.totalorder %s19, 0
      %s384 = scalar_select %p383, %s19, 0
      %s385 = smul.addr %s382, 8
      %s386 = sadd.s32 %s384, %s385
      %s387 = smul.addr %s386, 8
      %s388 = scalar_lea.vmem %s3, %s387
      // Predicated region
      $region33: #{soft_comp_forward.2} parent=31 // pred_check
        %p389 = pneg %p116
      $region34: #{soft_comp_forward.2} parent=31 // pred_check_branch
        %391 = sbr.rel (%p389) target = $region36
      $region35: #{soft_comp_forward.2} parent=31 // pred_region
        _
      $region36: #{soft_comp_forward.2} parent=31 // pred_fallthru
        _
    $region32: #{soft_comp_forward.2} parent=5 // pred_fallthru
      _
    %p392 = scmp.le.s32.totalorder 2, %s9
    // Predicated region
    $region37: #{soft_comp_forward.2} parent=5 // pred_check
      %p393 = pneg %p392
    $region38: #{soft_comp_forward.2} parent=5 // pred_check_branch
      %395 = sbr.rel (%p393) target = $region40
    $region39: #{soft_comp_forward.2} parent=5 // pred_region
      %s396 = ssub.s32 %s9, 2
      // Predicated region
      $region41: #{soft_comp_forward.2} parent=39 // pred_check
        %p397 = pneg %p122
      $region42: #{soft_comp_forward.2} parent=39 // pred_check_branch
        %399 = sbr.rel (%p397) target = $region44
      $region43: #{soft_comp_forward.2} parent=39 // pred_region
        %p400 = scmp.lt.s32.totalorder %s20, 3
        %s401 = scalar_select %p400, %s20, 3
        %p402 = scmp.lt.s32.totalorder %s21, 0
        %s403 = scalar_select %p402, %s21, 0
        %s404 = smul.addr %s401, 8
        %s405 = sadd.s32 %s403, %s404
        %s406 = smul.addr %s405, 8
        %s407 = scalar_lea.vmem %s3, %s406
      $region44: #{soft_comp_forward.2} parent=39 // pred_fallthru
        _
    $region40: #{soft_comp_forward.2} parent=5 // pred_fallthru
      _
  $region6: #{soft_comp_forward.2} parent=0 // loop_footer
    %s13 = sadd.s32 1, %s9
  $region7: #{soft_comp_forward.2} parent=0 // loop_footer_branch
    %8 = sbr.rel target = $region3
  $region8: #{soft_comp_forward.2} parent=0 // loop_exit
    _

// kernel: soft_comp_forward.3
$region0: #{soft_comp_forward.3}
  #allocation0 [shape = 'u32[]', space=smem, size = 0x4, offset = 0x4, fixed_abs, tag = 'smem constant byte address 0x4 - core index']
  #allocation1 [shape = 'u32[144,128]{1,0:T(1,128)}', space=vmem, size = 0x12000, scoped, tag = 'internal scratch']
  #allocation2 [shape = 'bf16[8,512]{1,0:T(8,128)(2,1)}', space=vmem, size = 0x2000, scoped, tag = 'scratch operand']
  %s0 = inlined_call_operand.vmem [shape: bf16[4,8,522], index: 0, kind: input, shape index: {}, may-alias: {0,1}]
  %s1 = inlined_call_operand.vmem [shape: bf16[4,8,522], index: 1, kind: input, shape index: {}, may-alias: {0,1}]
  %s2 = inlined_call_operand.vmem [shape: bf16[9,8,8], index: 2, kind: input, shape index: {}]
  %s3 = inlined_call_operand.vmem [shape: f32[8,1], index: 3, kind: input, shape index: {}]
  %s4 = inlined_call_operand.vmem [shape: f32[4,8,384], index: 4, kind: output, shape index: {}]
  %s5 = sld [smem:[#allocation0]]
  $region49: #{soft_comp_forward.3} parent=0
    _
  %s7 = ssub.s32 1, %s5
  %s8 = scalar_select 0, %s7, %s5
  loop: start=0, step=1, limit=6
  $region2: #{soft_comp_forward.3} parent=0 // loop_pre_header
    _
  $region3: #{soft_comp_forward.3} parent=0 // loop_header
    %s10 = sphi 0, %s14
    %p11 = scmp.ge.s32.totalorder %s10, 6
    %s17 = sphi 0, %s29
    %s18 = sphi 0, %s25
    %s19 = sphi 0, %s17
    %s20 = sphi 0, %s18
    %s21 = sphi 0, %s19
    %s22 = sphi 0, %s20
    %s34 = sphi 0, %s36
    %s37 = sphi 0, %s34
    %s38 = sphi 0, %s37
    %s54 = sphi 0, %s38
    %s66 = sphi 0, %s68
    %s69 = sphi 0, %s66
    %s70 = sphi 0, %s69
    %s86 = sphi 0, %s70
    %s90 = sphi 0, %s90
    %s92 = sphi 0, %s90
    %s93 = sphi 0, %s92
    %s107 = sphi 0, %s93
    %s111 = sphi 0, %s111
    %s113 = sphi 0, %s111
    %s114 = sphi 0, %s113
    %s128 = sphi 0, %s114
    %s136 = sphi 0, %s138
    %s139 = sphi 0, %s136
    %s140 = sphi 0, %s139
    %s156 = sphi 0, %s140
  $region4: #{soft_comp_forward.3} parent=0 // loop_header_branch
    %13 = sbr.rel (%p11) target = $region8
  $region5: #{soft_comp_forward.3} parent=0 // loop_body
    %s15 = ssub.s32 %s10, 1
    %s16 = ssub.s32 %s10, 2
    %s23 = sadd.s32 1, %s18
    %p24 = scmp.ge.s32.totalorder %s23, 1
    %s25 = scalar_select %p24, 0, %s23
    %s26 = sadd.s32 1, %s17
    %s27 = scalar_select %p24, %s26, %s17
    %p28 = scmp.ge.s32.totalorder %s27, 4
    %s29 = scalar_select %p28, 0, %s27
    %s30 = ssub.s32 %s17, %s29
    %s31 = ssub.s32 %s18, %s25
    %s32 = sor.u32 %s30, %s31
    %p33 = scmp.eq.s32.totalorder %s32, 0
    %s35 = sadd.s32 %s34, 1
    %s36 = scalar_select %p33, %s34, %s35
    %p39 = pneg %p33
    %p40 = scmp.eq.s32.totalorder %s10, 3
    %p41 = por %p39, %p40
    %p42 = scmp.ne.s32.totalorder %s34, %s37
    %p43 = scmp.eq.s32.totalorder %s10, 0
    %p44 = por %p42, %p43
    %p45 = scmp.ne.s32.totalorder %s34, %s37
    %p46 = scmp.eq.s32.totalorder %s15, 3
    %p47 = por %p45, %p46
    %p48 = scmp.ne.s32.totalorder %s37, %s38
    %p49 = scmp.eq.s32.totalorder %s15, 0
    %p50 = por %p48, %p49
    %p51 = scmp.ne.s32.totalorder %s37, %s38
    %p52 = scmp.eq.s32.totalorder %s16, 3
    %p53 = por %p51, %p52
    %p55 = scmp.ne.s32.totalorder %s38, %s54
    %p56 = scmp.eq.s32.totalorder %s16, 0
    %p57 = por %p55, %p56
    %s58 = sadd.s32 %s18, 1
    %s59 = smul.u32 %s58, 3
    %s60 = sadd.s32 %s25, 1
    %s61 = smul.u32 %s60, 3
    %s62 = ssub.s32 %s17, %s29
    %s63 = ssub.s32 %s59, %s61
    %s64 = sor.u32 %s62, %s63
    %p65 = scmp.eq.s32.totalorder %s64, 0
    %s67 = sadd.s32 %s66, 1
    %s68 = scalar_select %p65, %s66, %s67
    %p71 = pneg %p65
    %p72 = scmp.eq.s32.totalorder %s10, 3
    %p73 = por %p71, %p72
    %p74 = scmp.ne.s32.totalorder %s66, %s69
    %p75 = scmp.eq.s32.totalorder %s10, 0
    %p76 = por %p74, %p75
    %p77 = scmp.ne.s32.totalorder %s66, %s69
    %p78 = scmp.eq.s32.totalorder %s15, 3
    %p79 = por %p77, %p78
    %p80 = scmp.ne.s32.totalorder %s69, %s70
    %p81 = scmp.eq.s32.totalorder %s15, 0
    %p82 = por %p80, %p81
    %p83 = scmp.ne.s32.totalorder %s69, %s70
    %p84 = scmp.eq.s32.totalorder %s16, 3
    %p85 = por %p83, %p84
    %p87 = scmp.ne.s32.totalorder %s70, %s86
    %p88 = scmp.eq.s32.totalorder %s16, 0
    %p89 = por %p87, %p88
    %s91 = sadd.s32 %s90, 1
    %p94 = scmp.eq.s32.totalorder %s10, 3
    %p95 = scmp.ne.s32.totalorder %s90, %s92
    %p96 = scmp.eq.s32.totalorder %s10, 0
    %p97 = por %p95, %p96
    %p98 = scmp.ne.s32.totalorder %s90, %s92
    %p99 = scmp.eq.s32.totalorder %s15, 3
    %p100 = por %p98, %p99
    %p101 = scmp.ne.s32.totalorder %s92, %s93
    %p102 = scmp.eq.s32.totalorder %s15, 0
    %p103 = por %p101, %p102
    %p104 = scmp.ne.s32.totalorder %s92, %s93
    %p105 = scmp.eq.s32.totalorder %s16, 3
    %p106 = por %p104, %p105
    %p108 = scmp.ne.s32.totalorder %s93, %s107
    %p109 = scmp.eq.s32.totalorder %s16, 0
    %p110 = por %p108, %p109
    %s112 = sadd.s32 %s111, 1
    %p115 = scmp.eq.s32.totalorder %s10, 3
    %p116 = scmp.ne.s32.totalorder %s111, %s113
    %p117 = scmp.eq.s32.totalorder %s10, 0
    %p118 = por %p116, %p117
    %p119 = scmp.ne.s32.totalorder %s111, %s113
    %p120 = scmp.eq.s32.totalorder %s15, 3
    %p121 = por %p119, %p120
    %p122 = scmp.ne.s32.totalorder %s113, %s114
    %p123 = scmp.eq.s32.totalorder %s15, 0
    %p124 = por %p122, %p123
    %p125 = scmp.ne.s32.totalorder %s113, %s114
    %p126 = scmp.eq.s32.totalorder %s16, 3
    %p127 = por %p125, %p126
    %p129 = scmp.ne.s32.totalorder %s114, %s128
    %p130 = scmp.eq.s32.totalorder %s16, 0
    %p131 = por %p129, %p130
    %s132 = ssub.s32 %s17, %s29
    %s133 = ssub.s32 %s18, %s25
    %s134 = sor.u32 %s132, %s133
    %p135 = scmp.eq.s32.totalorder %s134, 0
    %s137 = sadd.s32 %s136, 1
    %s138 = scalar_select %p135, %s136, %s137
    %p141 = pneg %p135
    %p142 = scmp.eq.s32.totalorder %s10, 3
    %p143 = por %p141, %p142
    %p144 = scmp.ne.s32.totalorder %s136, %s139
    %p145 = scmp.eq.s32.totalorder %s10, 0
    %p146 = por %p144, %p145
    %p147 = scmp.ne.s32.totalorder %s136, %s139
    %p148 = scmp.eq.s32.totalorder %s15, 3
    %p149 = por %p147, %p148
    %p150 = scmp.ne.s32.totalorder %s139, %s140
    %p151 = scmp.eq.s32.totalorder %s15, 0
    %p152 = por %p150, %p151
    %p153 = scmp.ne.s32.totalorder %s139, %s140
    %p154 = scmp.eq.s32.totalorder %s16, 3
    %p155 = por %p153, %p154
    %p157 = scmp.ne.s32.totalorder %s140, %s156
    %p158 = scmp.eq.s32.totalorder %s16, 0
    %p159 = por %p157, %p158
    %p160 = scmp.le.s32.totalorder 1, %s10
    %p161 = scmp.lt.s32.totalorder %s10, 5
    %p162 = pnand %p160, %p161
    %p163 = pneg %p162
    // Predicated region
    $region9: #{soft_comp_forward.3} parent=5 // pred_check
      _
    $region10: #{soft_comp_forward.3} parent=5 // pred_check_branch
      %165 = sbr.rel (%p162) target = $region12
    $region11: #{soft_comp_forward.3} parent=5 // pred_region
      %s166 = ssub.s32 %s10, 1
      // Predicated region
      $region13: #{soft_comp_forward.3} parent=11 // pred_check
        %p167 = pneg %p103
      $region14: #{soft_comp_forward.3} parent=11 // pred_check_branch
        %169 = sbr.rel (%p167) target = $region16
      $region15: #{soft_comp_forward.3} parent=11 // pred_region
        _
      $region16: #{soft_comp_forward.3} parent=11 // pred_fallthru
        _
      // Predicated region
      $region17: #{soft_comp_forward.3} parent=11 // pred_check
        %p170 = pneg %p124
      $region18: #{soft_comp_forward.3} parent=11 // pred_check_branch
        %172 = sbr.rel (%p170) target = $region20
      $region19: #{soft_comp_forward.3} parent=11 // pred_region
        _
      $region20: #{soft_comp_forward.3} parent=11 // pred_fallthru
        _
    $region12: #{soft_comp_forward.3} parent=5 // pred_fallthru
      _
    %p173 = scmp.lt.s32.totalorder %s10, 4
    // Predicated region
    $region21: #{soft_comp_forward.3} parent=5 // pred_check
      %p174 = pneg %p173
    $region22: #{soft_comp_forward.3} parent=5 // pred_check_branch
      %176 = sbr.rel (%p174) target = $region24
    $region23: #{soft_comp_forward.3} parent=5 // pred_region
      // Predicated region
      $region25: #{soft_comp_forward.3} parent=23 // pred_check
        %p177 = pneg %p44
      $region26: #{soft_comp_forward.3} parent=23 // pred_check_branch
        %179 = sbr.rel (%p177) target = $region28
      $region27: #{soft_comp_forward.3} parent=23 // pred_region
        %s180 = smul.u32 3, %s18
        %s181 = ssub.s32 5, %s180
        %p182 = scmp.lt.s32.totalorder %s181, 3
        %s183 = scalar_select %p182, %s181, 3
        %s184 = smul.u32 64, %s183
        %p185 = scmp.lt.s32.totalorder %s17, 3
        %s186 = scalar_select %p185, %s17, 3
        %p187 = scmp.lt.s32.totalorder %s180, 4
        %s188 = scalar_select %p187, %s180, 4
        %s189 = smul.addr %s186, 5
        %s190 = sadd.s32 %s188, %s189
        %s191 = smul.addr %s190, 4
        %s192 = scalar_lea.vmem %s0, %s191
        %s193 = smul.u32 3, %s18
        %s194 = ssub.s32 5, %s193
        %p195 = scmp.lt.s32.totalorder %s194, 3
        %s196 = scalar_select %p195, %s194, 3
        %s197 = smul.u32 64, %s196
      $region28: #{soft_comp_forward.3} parent=23 // pred_fallthru
        _
      // Predicated region
      $region29: #{soft_comp_forward.3} parent=23 // pred_check
        %p198 = pneg %p76
      $region30: #{soft_comp_forward.3} parent=23 // pred_check_branch
        %200 = sbr.rel (%p198) target = $region32
      $region31: #{soft_comp_forward.3} parent=23 // pred_region
        %s201 = sadd.s32 %s18, 1
        %s202 = smul.u32 %s201, 3
        %p203 = scmp.lt.s32.totalorder %s17, 3
        %s204 = scalar_select %p203, %s17, 3
        %p205 = scmp.lt.s32.totalorder %s202, 4
        %s206 = scalar_select %p205, %s202, 4
        %s207 = smul.addr %s204, 5
        %s208 = sadd.s32 %s206, %s207
        %s209 = smul.addr %s208, 4
        %s210 = scalar_lea.vmem %s1, %s209
        %s211 = sadd.s32 %s18, 1
        %s212 = smul.u32 %s211, 3
      $region32: #{soft_comp_forward.3} parent=23 // pred_fallthru
        _
    $region24: #{soft_comp_forward.3} parent=5 // pred_fallthru
      _
    %p213 = scmp.le.s32.totalorder 1, %s10
    %p214 = scmp.lt.s32.totalorder %s10, 5
    %p215 = pnand %p213, %p214
    %p216 = pneg %p215
    // Predicated region
    $region33: #{soft_comp_forward.3} parent=5 // pred_check
      _
    $region34: #{soft_comp_forward.3} parent=5 // pred_check_branch
      %218 = sbr.rel (%p215) target = $region36
    $region35: #{soft_comp_forward.3} parent=5 // pred_region
      %s219 = ssub.s32 %s10, 1
      %s220 = smul.u32 3, %s20
      %s221 = ssub.s32 5, %s220
      %p222 = scmp.lt.s32.totalorder %s221, 3
      %s223 = scalar_select %p222, %s221, 3
      %s224 = smul.u32 64, %s223
      %p225 = scmp.lt.s32.totalorder %s19, 3
      %s226 = scalar_select %p225, %s19, 3
      %p227 = scmp.lt.s32.totalorder %s220, 4
      %s228 = scalar_select %p227, %s220, 4
      %s229 = smul.addr %s226, 5
      %s230 = sadd.s32 %s228, %s229
      %s231 = smul.addr %s230, 4
      %s232 = scalar_lea.vmem %s0, %s231
      %p233 = pneg %p50
      %p234 = pneg %p47
      %s235 = sadd.s32 %s20, 1
      %s236 = smul.u32 %s235, 3
      %p237 = scmp.lt.s32.totalorder %s19, 3
      %s238 = scalar_select %p237, %s19, 3
      %p239 = scmp.lt.s32.totalorder %s236, 4
      %s240 = scalar_select %p239, %s236, 4
      %s241 = smul.addr %s238, 5
      %s242 = sadd.s32 %s240, %s241
      %s243 = smul.addr %s242, 4
      %s244 = scalar_lea.vmem %s1, %s243
      %p245 = pneg %p82
      %p246 = pneg %p79
      %p247 = pneg %p103
      %p248 = pneg %p100
      %p249 = pneg %p124
      %p250 = pneg %p121
      %p251 = pneg %p152
      %p252 = pneg %p149
      %s253 = smul.u32 3, %s20
      %p254 = scmp.lt.s32.totalorder %s19, 3
      %s255 = scalar_select %p254, %s19, 3
      %p256 = scmp.lt.s32.totalorder %s253, 2
      %s257 = scalar_select %p256, %s253, 2
      %s258 = smul.addr %s255, 3
      %s259 = sadd.s32 %s257, %s258
      %s260 = smul.addr %s259, 8
      %s261 = scalar_lea.vmem %s4, %s260
      %s262 = smul.u32 3, %s20
      %s263 = ssub.s32 5, %s262
      %p264 = scmp.lt.s32.totalorder %s263, 3
      %s265 = scalar_select %p264, %s263, 3
      %s266 = smul.u32 64, %s265
      %p267 = scmp.lt.s32.totalorder %s19, 3
      %s268 = scalar_select %p267, %s19, 3
      %p269 = scmp.lt.s32.totalorder %s262, 4
      %s270 = scalar_select %p269, %s262, 4
      %s271 = smul.addr %s268, 5
      %s272 = sadd.s32 %s270, %s271
      %s273 = smul.addr %s272, 4
      %s274 = scalar_lea.vmem %s0, %s273
      %s275 = smul.u32 3, %s20
      %s276 = ssub.s32 5, %s275
      %p277 = scmp.lt.s32.totalorder %s276, 3
      %s278 = scalar_select %p277, %s276, 3
      %s279 = smul.u32 64, %s278
      %s280 = sadd.s32 %s20, 1
      %s281 = smul.u32 %s280, 3
      %p282 = scmp.lt.s32.totalorder %s19, 3
      %s283 = scalar_select %p282, %s19, 3
      %p284 = scmp.lt.s32.totalorder %s281, 4
      %s285 = scalar_select %p284, %s281, 4
      %s286 = smul.addr %s283, 5
      %s287 = sadd.s32 %s285, %s286
      %s288 = smul.addr %s287, 4
      %s289 = scalar_lea.vmem %s1, %s288
      %s290 = sadd.s32 %s20, 1
      %s291 = smul.u32 %s290, 3
      %s292 = smul.u32 3, %s20
      %p293 = scmp.lt.s32.totalorder %s19, 3
      %s294 = scalar_select %p293, %s19, 3
      %p295 = scmp.lt.s32.totalorder %s292, 2
      %s296 = scalar_select %p295, %s292, 2
      %s297 = smul.addr %s294, 3
      %s298 = sadd.s32 %s296, %s297
      %s299 = smul.addr %s298, 8
      %s300 = scalar_lea.vmem %s4, %s299
      %s301 = smul.u32 3, %s20
      %v303 = vld [vmem:[%s274] sm:$0xff]
      %v304 = vld [vmem:[%s274 + $0x8] sm:$0xf]
      %305 = vst [vmem:[#allocation2] sm:$0xff] %v303
      %306 = vst [vmem:[#allocation2 + $0x8] sm:$0xf] %v304
      %v307 = vld [vmem:[%s289] sm:$0xf]
      %308 = vst [vmem:[#allocation2 + $0xc] sm:$0xf] %v307
      %v309 = vld [vmem:[#allocation2] sm:$0xff]
      %v310 = vld [vmem:[#allocation2 + $0x8] sm:$0xff]
      %v311 = vld [vmem:[%s2] sm:$0xf]
      %s312 = scalar_lea.vmem %s2, 4
      %v313 = vld [vmem:[%s312] sm:$0xf]
      %v316 = vunpack.c.l.b16 %v309
      %v317 = vunpack.c.h.b16 %v309
      %v318 = vunpack.c.l.b16 %v310
      %v319 = vunpack.c.h.b16 %v310
      %v320 = vpack.c.b16 %v316, %v316
      %v321 = vpack.c.b16 %v317, %v317
      %v322 = vpack.c.b16 %v318, %v318
      %v323 = vpack.c.b16 %v319, %v319
      %324 = vrot.lane.b32.xlu0 %v320, 127
      %v325 = vpop.permute.xlu0 %324
      %326 = vrot.lane.b32.xlu0 %v321, 127
      %v327 = vpop.permute.xlu0 %326
      %328 = vrot.lane.b32.xlu0 %v322, 127
      %v329 = vpop.permute.xlu0 %328
      %330 = vrot.lane.b32.xlu0 %v323, 127
      %v331 = vpop.permute.xlu0 %330
      %vm332 = vcmask 1039360
      %v333 = vsel %vm332, %v325, %v327
      %v334 = vsel %vm332, %v327, %v329
      %v335 = vsel %vm332, %v329, %v331
      %vm336 = vcmask 64512
      %v338 = vsel %vm336, %v313, 0
      %vm340 = vcmask 1043456
      %v342 = vsel %vm340, %v333, 0
      %v345 = vsel %vm340, %v334, 0
      %v348 = vsel %vm340, %v335, 0
      %350 = vmatprep.subr.bf16.mxu0 %v345
      %351 = vmatpush1.bf16.msra.mxu0 %v342
      %352 = vmatprep.subr.bf16.mxu0 0
      %353 = vmatpush1.bf16.msra.mxu0 0
      %354 = vmatprep.subr.bf16.mxu0 0
      %355 = vmatpush1.bf16.msra.mxu0 0
      %356 = vmatprep.subr.bf16.mxu0 0
      %357 = vmatpush1.bf16.msra.mxu0 0
      %358 = vmatprep.subr.bf16.mxu0 0
      %359 = vmatpush1.bf16.msra.mxu0 0
      %360 = vmatprep.subr.bf16.mxu0 0
      %361 = vmatpush1.bf16.msra.mxu0 0
      %362 = vmatprep.subr.bf16.mxu0 0
      %363 = vmatpush1.bf16.msra.mxu0 0
      %364 = vmatprep.subr.bf16.mxu0 0
      %365 = vmatpush1.bf16.msra.mxu0 0
      %366 = vmatprep.subr.bf16.mxu0 0
      %367 = vmatpush1.bf16.msra.mxu0 0
      %368 = vmatprep.subr.bf16.mxu0 0
      %369 = vmatpush1.bf16.msra.mxu0 0
      %370 = vmatprep.subr.bf16.mxu0 0
      %371 = vmatpush1.bf16.msra.mxu0 0
      %372 = vmatprep.subr.bf16.mxu0 0
      %373 = vmatpush1.bf16.msra.mxu0 0
      %374 = vmatprep.subr.bf16.mxu0 0
      %375 = vmatpush1.bf16.msra.mxu0 0
      %376 = vmatprep.subr.bf16.mxu0 0
      %377 = vmatpush1.bf16.msra.mxu0 0
      %378 = vmatprep.subr.bf16.mxu0 0
      %379 = vmatpush1.bf16.msra.mxu0 0
      %380 = vmatprep.subr.bf16.mxu0 0
      %381 = vmatpush1.bf16.msra.mxu0 0
      %382 = vmatprep.mubr.bf16.mxu0 0
      %383 = vmatmul.mubr.bf16.gmra.mrb[0].mxu0 %v338
      %v384 = vpop.f32.mrb[0].mxu0
      %v385 = vadd.f32 0.0, %v384
      %v386 = vpop.f32.mrb[0].mxu0
      %v387 = vadd.f32 0.0, %v386
      %v388 = vpop.f32.mrb[0].mxu0
      %v389 = vpop.f32.mrb[0].mxu0
      %390 = vdwg.mxu0
      %391 = vmatprep.subr.bf16.mxu0 0
      %392 = vmatpush1.bf16.msra.mxu0 %v348
      %393 = vmatprep.subr.bf16.mxu0 0
      %394 = vmatpush1.bf16.msra.mxu0 0
      %395 = vmatprep.subr.bf16.mxu0 0
      %396 = vmatpush1.bf16.msra.mxu0 0
      %397 = vmatprep.subr.bf16.mxu0 0
      %398 = vmatpush1.bf16.msra.mxu0 0
      %399 = vmatprep.subr.bf16.mxu0 0
      %400 = vmatpush1.bf16.msra.mxu0 0
      %401 = vmatprep.subr.bf16.mxu0 0
      %402 = vmatpush1.bf16.msra.mxu0 0
      %403 = vmatprep.subr.bf16.mxu0 0
      %404 = vmatpush1.bf16.msra.mxu0 0
      %405 = vmatprep.subr.bf16.mxu0 0
      %406 = vmatpush1.bf16.msra.mxu0 0
      %407 = vmatprep.subr.bf16.mxu0 0
      %408 = vmatpush1.bf16.msra.mxu0 0
      %409 = vmatprep.subr.bf16.mxu0 0
      %410 = vmatpush1.bf16.msra.mxu0 0
      %411 = vmatprep.subr.bf16.mxu0 0
      %412 = vmatpush1.bf16.msra.mxu0 0
      %413 = vmatprep.subr.bf16.mxu0 0
      %414 = vmatpush1.bf16.msra.mxu0 0
      %415 = vmatprep.subr.bf16.mxu0 0
      %416 = vmatpush1.bf16.msra.mxu0 0
      %417 = vmatprep.subr.bf16.mxu0 0
      %418 = vmatpush1.bf16.msra.mxu0 0
      %419 = vmatprep.subr.bf16.mxu0 0
      %420 = vmatpush1.bf16.msra.mxu0 0
      %421 = vmatprep.subr.bf16.mxu0 0
      %422 = vmatpush1.bf16.msra.mxu0 0
      %423 = vmatprep.mubr.bf16.mxu0 0
      %424 = vmatmul.mubr.bf16.gmra.mrb[0].mxu0 %v338
      %v425 = vpop.f32.mrb[0].mxu0
      %v426 = vadd.f32 0.0, %v425
      %v427 = vpop.f32.mrb[0].mxu0
      %v428 = vpop.f32.mrb[0].mxu0
      %v429 = vpop.f32.mrb[0].mxu0
      %430 = vdwg.mxu0
      %v432 = vsel %vm336, %v311, 0
      %v435 = vsel %vm340, %v320, 0
      %v438 = vsel %vm340, %v321, 0
      %v441 = vsel %vm340, %v322, 0
      %443 = vmatprep.subr.bf16.mxu0 %v438
      %444 = vmatpush1.bf16.msra.mxu0 %v435
      %445 = vmatprep.subr.bf16.mxu0 0
      %446 = vmatpush1.bf16.msra.mxu0 0
      %447 = vmatprep.subr.bf16.mxu0 0
      %448 = vmatpush1.bf16.msra.mxu0 0
      %449 = vmatprep.subr.bf16.mxu0 0
      %450 = vmatpush1.bf16.msra.mxu0 0
      %451 = vmatprep.subr.bf16.mxu0 0
      %452 = vmatpush1.bf16.msra.mxu0 0
      %453 = vmatprep.subr.bf16.mxu0 0
      %454 = vmatpush1.bf16.msra.mxu0 0
      %455 = vmatprep.subr.bf16.mxu0 0
      %456 = vmatpush1.bf16.msra.mxu0 0
      %457 = vmatprep.subr.bf16.mxu0 0
      %458 = vmatpush1.bf16.msra.mxu0 0
      %459 = vmatprep.subr.bf16.mxu0 0
      %460 = vmatpush1.bf16.msra.mxu0 0
      %461 = vmatprep.subr.bf16.mxu0 0
      %462 = vmatpush1.bf16.msra.mxu0 0
      %463 = vmatprep.subr.bf16.mxu0 0
      %464 = vmatpush1.bf16.msra.mxu0 0
      %465 = vmatprep.subr.bf16.mxu0 0
      %466 = vmatpush1.bf16.msra.mxu0 0
      %467 = vmatprep.subr.bf16.mxu0 0
      %468 = vmatpush1.bf16.msra.mxu0 0
      %469 = vmatprep.subr.bf16.mxu0 0
      %470 = vmatpush1.bf16.msra.mxu0 0
      %471 = vmatprep.subr.bf16.mxu0 0
      %472 = vmatpush1.bf16.msra.mxu0 0
      %473 = vmatprep.subr.bf16.mxu0 0
      %474 = vmatpush1.bf16.msra.mxu0 0
      %475 = vmatprep.mubr.bf16.mxu0 0
      %476 = vmatmul.mubr.bf16.gmra.mrb[0].mxu0 %v432
      %v477 = vpop.f32.mrb[0].mxu0
      %v478 = vadd.f32 %v385, %v477
      %v479 = vpop.f32.mrb[0].mxu0
      %v480 = vadd.f32 %v387, %v479
      %v481 = vpop.f32.mrb[0].mxu0
      %v482 = vpop.f32.mrb[0].mxu0
      %483 = vdwg.mxu0
      %484 = vmatprep.subr.bf16.mxu0 0
      %485 = vmatpush1.bf16.msra.mxu0 %v441
      %486 = vmatprep.subr.bf16.mxu0 0
      %487 = vmatpush1.bf16.msra.mxu0 0
      %488 = vmatprep.subr.bf16.mxu0 0
      %489 = vmatpush1.bf16.msra.mxu0 0
      %490 = vmatprep.subr.bf16.mxu0 0
      %491 = vmatpush1.bf16.msra.mxu0 0
      %492 = vmatprep.subr.bf16.mxu0 0
      %493 = vmatpush1.bf16.msra.mxu0 0
      %494 = vmatprep.subr.bf16.mxu0 0
      %495 = vmatpush1.bf16.msra.mxu0 0
      %496 = vmatprep.subr.bf16.mxu0 0
      %497 = vmatpush1.bf16.msra.mxu0 0
      %498 = vmatprep.subr.bf16.mxu0 0
      %499 = vmatpush1.bf16.msra.mxu0 0
      %500 = vmatprep.subr.bf16.mxu0 0
      %501 = vmatpush1.bf16.msra.mxu0 0
      %502 = vmatprep.subr.bf16.mxu0 0
      %503 = vmatpush1.bf16.msra.mxu0 0
      %504 = vmatprep.subr.bf16.mxu0 0
      %505 = vmatpush1.bf16.msra.mxu0 0
      %506 = vmatprep.subr.bf16.mxu0 0
      %507 = vmatpush1.bf16.msra.mxu0 0
      %508 = vmatprep.subr.bf16.mxu0 0
      %509 = vmatpush1.bf16.msra.mxu0 0
      %510 = vmatprep.subr.bf16.mxu0 0
      %511 = vmatpush1.bf16.msra.mxu0 0
      %512 = vmatprep.subr.bf16.mxu0 0
      %513 = vmatpush1.bf16.msra.mxu0 0
      %514 = vmatprep.subr.bf16.mxu0 0
      %515 = vmatpush1.bf16.msra.mxu0 0
      %516 = vmatprep.mubr.bf16.mxu0 0
      %517 = vmatmul.mubr.bf16.gmra.mrb[0].mxu0 %v432
      %v518 = vpop.f32.mrb[0].mxu0
      %v519 = vadd.f32 %v426, %v518
      %v520 = vpop.f32.mrb[0].mxu0
      %v521 = vpop.f32.mrb[0].mxu0
      %v522 = vpop.f32.mrb[0].mxu0
      %523 = vdwg.mxu0
      %s524 = scalar_lea.vmem %s2, 8
      %v525 = vld [vmem:[%s524] sm:$0xf]
      %526 = vrot.lane.b32.xlu0 %v320, 126
      %v527 = vpop.permute.xlu0 %526
      %528 = vrot.lane.b32.xlu0 %v321, 126
      %v529 = vpop.permute.xlu0 %528
      %530 = vrot.lane.b32.xlu0 %v322, 126
      %v531 = vpop.permute.xlu0 %530
      %532 = vrot.lane.b32.xlu0 %v323, 126
      %v533 = vpop.permute.xlu0 %532
      %vm534 = vcmask 1031168
      %v535 = vsel %vm534, %v527, %v529
      %v536 = vsel %vm534, %v529, %v531
      %v537 = vsel %vm534, %v531, %v533
      %v539 = vsel %vm336, %v525, 0
      %v542 = vsel %vm340, %v535, 0
      %v545 = vsel %vm340, %v536, 0
      %v548 = vsel %vm340, %v537, 0
      %550 = vmatprep.subr.bf16.mxu0 %v545
      %551 = vmatpush1.bf16.msra.mxu0 %v542
      %552 = vmatprep.subr.bf16.mxu0 0
      %553 = vmatpush1.bf16.msra.mxu0 0
      %554 = vmatprep.subr.bf16.mxu0 0
      %555 = vmatpush1.bf16.msra.mxu0 0
      %556 = vmatprep.subr.bf16.mxu0 0
      %557 = vmatpush1.bf16.msra.mxu0 0
      %558 = vmatprep.subr.bf16.mxu0 0
      %559 = vmatpush1.bf16.msra.mxu0 0
      %560 = vmatprep.subr.bf16.mxu0 0
      %561 = vmatpush1.bf16.msra.mxu0 0
      %562 = vmatprep.subr.bf16.mxu0 0
      %563 = vmatpush1.bf16.msra.mxu0 0
      %564 = vmatprep.subr.bf16.mxu0 0
      %565 = vmatpush1.bf16.msra.mxu0 0
      %566 = vmatprep.subr.bf16.mxu0 0
      %567 = vmatpush1.bf16.msra.mxu0 0
      %568 = vmatprep.subr.bf16.mxu0 0
      %569 = vmatpush1.bf16.msra.mxu0 0
      %570 = vmatprep.subr.bf16.mxu0 0
      %571 = vmatpush1.bf16.msra.mxu0 0
      %572 = vmatprep.subr.bf16.mxu0 0
      %573 = vmatpush1.bf16.msra.mxu0 0
      %574 = vmatprep.subr.bf16.mxu0 0
      %575 = vmatpush1.bf16.msra.mxu0 0
      %576 = vmatprep.subr.bf16.mxu0 0
      %577 = vmatpush1.bf16.msra.mxu0 0
      %578 = vmatprep.subr.bf16.mxu0 0
      %579 = vmatpush1.bf16.msra.mxu0 0
      %580 = vmatprep.subr.bf16.mxu0 0
      %581 = vmatpush1.bf16.msra.mxu0 0
      %582 = vmatprep.mubr.bf16.mxu0 0
      %583 = vmatmul.mubr.bf16.gmra.mrb[0].mxu0 %v539
      %v584 = vpop.f32.mrb[0].mxu0
      %v585 = vadd.f32 0.0, %v584
      %v586 = vpop.f32.mrb[0].mxu0
      %v587 = vadd.f32 0.0, %v586
      %v588 = vpop.f32.mrb[0].mxu0
      %v589 = vpop.f32.mrb[0].mxu0
      %590 = vdwg.mxu0
      %591 = vmatprep.subr.bf16.mxu0 0
      %592 = vmatpush1.bf16.msra.mxu0 %v548
      %593 = vmatprep.subr.bf16.mxu0 0
      %594 = vmatpush1.bf16.msra.mxu0 0
      %595 = vmatprep.subr.bf16.mxu0 0
      %596 = vmatpush1.bf16.msra.mxu0 0
      %597 = vmatprep.subr.bf16.mxu0 0
      %598 = vmatpush1.bf16.msra.mxu0 0
      %599 = vmatprep.subr.bf16.mxu0 0
      %600 = vmatpush1.bf16.msra.mxu0 0
      %601 = vmatprep.subr.bf16.mxu0 0
      %602 = vmatpush1.bf16.msra.mxu0 0
      %603 = vmatprep.subr.bf16.mxu0 0
      %604 = vmatpush1.bf16.msra.mxu0 0
      %605 = vmatprep.subr.bf16.mxu0 0
      %606 = vmatpush1.bf16.msra.mxu0 0
      %607 = vmatprep.subr.bf16.mxu0 0
      %608 = vmatpush1.bf16.msra.mxu0 0
      %609 = vmatprep.subr.bf16.mxu0 0
      %610 = vmatpush1.bf16.msra.mxu0 0
      %611 = vmatprep.subr.bf16.mxu0 0
      %612 = vmatpush1.bf16.msra.mxu0 0
      %613 = vmatprep.subr.bf16.mxu0 0
      %614 = vmatpush1.bf16.msra.mxu0 0
      %615 = vmatprep.subr.bf16.mxu0 0
      %616 = vmatpush1.bf16.msra.mxu0 0
      %617 = vmatprep.subr.bf16.mxu0 0
      %618 = vmatpush1.bf16.msra.mxu0 0
      %619 = vmatprep.subr.bf16.mxu0 0
      %620 = vmatpush1.bf16.msra.mxu0 0
      %621 = vmatprep.subr.bf16.mxu0 0
      %622 = vmatpush1.bf16.msra.mxu0 0
      %623 = vmatprep.mubr.bf16.mxu0 0
      %624 = vmatmul.mubr.bf16.gmra.mrb[0].mxu0 %v539
      %v625 = vpop.f32.mrb[0].mxu0
      %v626 = vadd.f32 0.0, %v625
      %v627 = vpop.f32.mrb[0].mxu0
      %v628 = vpop.f32.mrb[0].mxu0
      %v629 = vpop.f32.mrb[0].mxu0
      %630 = vdwg.mxu0
      %v631 = vadd.f32 %v478, %v585
      %v632 = vadd.f32 %v480, %v587
      %v633 = vadd.f32 %v519, %v626
      %s634 = scalar_lea.vmem %s2, 12
      %v635 = vld [vmem:[%s634] sm:$0xf]
      %636 = vrot.lane.b32.xlu0 %v320, 110
      %v637 = vpop.permute.xlu0 %636
      %638 = vrot.lane.b32.xlu0 %v321, 110
      %v639 = vpop.permute.xlu0 %638
      %640 = vrot.lane.b32.xlu0 %v322, 110
      %v641 = vpop.permute.xlu0 %640
      %642 = vrot.lane.b32.xlu0 %v323, 110
      %v643 = vpop.permute.xlu0 %642
      %vm644 = vcmask 900096
      %v645 = vsel %vm644, %v637, %v639
      %v646 = vsel %vm644, %v639, %v641
      %v647 = vsel %vm644, %v641, %v643
      %v649 = vsel %vm336, %v635, 0
      %v652 = vsel %vm340, %v645, 0
      %v655 = vsel %vm340, %v646, 0
      %v658 = vsel %vm340, %v647, 0
      %660 = vmatprep.subr.bf16.mxu0 %v655
      %661 = vmatpush1.bf16.msra.mxu0 %v652
      %662 = vmatprep.subr.bf16.mxu0 0
      %663 = vmatpush1.bf16.msra.mxu0 0
      %664 = vmatprep.subr.bf16.mxu0 0
      %665 = vmatpush1.bf16.msra.mxu0 0
      %666 = vmatprep.subr.bf16.mxu0 0
      %667 = vmatpush1.bf16.msra.mxu0 0
      %668 = vmatprep.subr.bf16.mxu0 0
      %669 = vmatpush1.bf16.msra.mxu0 0
      %670 = vmatprep.subr.bf16.mxu0 0
      %671 = vmatpush1.bf16.msra.mxu0 0
      %672 = vmatprep.subr.bf16.mxu0 0
      %673 = vmatpush1.bf16.msra.mxu0 0
      %674 = vmatprep.subr.bf16.mxu0 0
      %675 = vmatpush1.bf16.msra.mxu0 0
      %676 = vmatprep.subr.bf16.mxu0 0
      %677 = vmatpush1.bf16.msra.mxu0 0
      %678 = vmatprep.subr.bf16.mxu0 0
      %679 = vmatpush1.bf16.msra.mxu0 0
      %680 = vmatprep.subr.bf16.mxu0 0
      %681 = vmatpush1.bf16.msra.mxu0 0
      %682 = vmatprep.subr.bf16.mxu0 0
      %683 = vmatpush1.bf16.msra.mxu0 0
      %684 = vmatprep.subr.bf16.mxu0 0
      %685 = vmatpush1.bf16.msra.mxu0 0
      %686 = vmatprep.subr.bf16.mxu0 0
      %687 = vmatpush1.bf16.msra.mxu0 0
      %688 = vmatprep.subr.bf16.mxu0 0
      %689 = vmatpush1.bf16.msra.mxu0 0
      %690 = vmatprep.subr.bf16.mxu0 0
      %691 = vmatpush1.bf16.msra.mxu0 0
      %692 = vmatprep.mubr.bf16.mxu0 0
      %693 = vmatmul.mubr.bf16.gmra.mrb[0].mxu0 %v649
      %v694 = vpop.f32.mrb[0].mxu0
      %v695 = vadd.f32 0.0, %v694
      %v696 = vpop.f32.mrb[0].mxu0
      %v697 = vadd.f32 0.0, %v696
      %v698 = vpop.f32.mrb[0].mxu0
      %v699 = vpop.f32.mrb[0].mxu0
      %700 = vdwg.mxu0
      %701 = vmatprep.subr.bf16.mxu0 0
      %702 = vmatpush1.bf16.msra.mxu0 %v658
      %703 = vmatprep.subr.bf16.mxu0 0
      %704 = vmatpush1.bf16.msra.mxu0 0
      %705 = vmatprep.subr.bf16.mxu0 0
      %706 = vmatpush1.bf16.msra.mxu0 0
      %707 = vmatprep.subr.bf16.mxu0 0
      %708 = vmatpush1.bf16.msra.mxu0 0
      %709 = vmatprep.subr.bf16.mxu0 0
      %710 = vmatpush1.bf16.msra.mxu0 0
      %711 = vmatprep.subr.bf16.mxu0 0
      %712 = vmatpush1.bf16.msra.mxu0 0
      %713 = vmatprep.subr.bf16.mxu0 0
      %714 = vmatpush1.bf16.msra.mxu0 0
      %715 = vmatprep.subr.bf16.mxu0 0
      %716 = vmatpush1.bf16.msra.mxu0 0
      %717 = vmatprep.subr.bf16.mxu0 0
      %718 = vmatpush1.bf16.msra.mxu0 0
      %719 = vmatprep.subr.bf16.mxu0 0
      %720 = vmatpush1.bf16.msra.mxu0 0
      %721 = vmatprep.subr.bf16.mxu0 0
      %722 = vmatpush1.bf16.msra.mxu0 0
      %723 = vmatprep.subr.bf16.mxu0 0
      %724 = vmatpush1.bf16.msra.mxu0 0
      %725 = vmatprep.subr.bf16.mxu0 0
      %726 = vmatpush1.bf16.msra.mxu0 0
      %727 = vmatprep.subr.bf16.mxu0 0
      %728 = vmatpush1.bf16.msra.mxu0 0
      %729 = vmatprep.subr.bf16.mxu0 0
      %730 = vmatpush1.bf16.msra.mxu0 0
      %731 = vmatprep.subr.bf16.mxu0 0
      %732 = vmatpush1.bf16.msra.mxu0 0
      %733 = vmatprep.mubr.bf16.mxu0 0
      %734 = vmatmul.mubr.bf16.gmra.mrb[0].mxu0 %v649
      %v735 = vpop.f32.mrb[0].mxu0
      %v736 = vadd.f32 0.0, %v735
      %v737 = vpop.f32.mrb[0].mxu0
      %v738 = vpop.f32.mrb[0].mxu0
      %v739 = vpop.f32.mrb[0].mxu0
      %740 = vdwg.mxu0
      %v741 = vadd.f32 %v631, %v695
      %v742 = vadd.f32 %v632, %v697
      %v743 = vadd.f32 %v633, %v736
      %s744 = scalar_lea.vmem %s2, 16
      %v745 = vld [vmem:[%s744] sm:$0xf]
      %746 = vrot.lane.b32.xlu0 %v320, 109
      %v747 = vpop.permute.xlu0 %746
      %748 = vrot.lane.b32.xlu0 %v321, 109
      %v749 = vpop.permute.xlu0 %748
      %750 = vrot.lane.b32.xlu0 %v322, 109
      %v751 = vpop.permute.xlu0 %750
      %752 = vrot.lane.b32.xlu0 %v323, 109
      %v753 = vpop.permute.xlu0 %752
      %vm754 = vcmask 891904
      %v755 = vsel %vm754, %v747, %v749
      %v756 = vsel %vm754, %v749, %v751
      %v757 = vsel %vm754, %v751, %v753
      %v759 = vsel %vm336, %v745, 0
      %v762 = vsel %vm340, %v755, 0
      %v765 = vsel %vm340, %v756, 0
      %v768 = vsel %vm340, %v757, 0
      %770 = vmatprep.subr.bf16.mxu0 %v765
      %771 = vmatpush1.bf16.msra.mxu0 %v762
      %772 = vmatprep.subr.bf16.mxu0 0
      %773 = vmatpush1.bf16.msra.mxu0 0
      %774 = vmatprep.subr.bf16.mxu0 0
      %775 = vmatpush1.bf16.msra.mxu0 0
      %776 = vmatprep.subr.bf16.mxu0 0
      %777 = vmatpush1.bf16.msra.mxu0 0
      %778 = vmatprep.subr.bf16.mxu0 0
      %779 = vmatpush1.bf16.msra.mxu0 0
      %780 = vmatprep.subr.bf16.mxu0 0
      %781 = vmatpush1.bf16.msra.mxu0 0
      %782 = vmatprep.subr.bf16.mxu0 0
      %783 = vmatpush1.bf16.msra.mxu0 0
      %784 = vmatprep.subr.bf16.mxu0 0
      %785 = vmatpush1.bf16.msra.mxu0 0
      %786 = vmatprep.subr.bf16.mxu0 0
      %787 = vmatpush1.bf16.msra.mxu0 0
      %788 = vmatprep.subr.bf16.mxu0 0
      %789 = vmatpush1.bf16.msra.mxu0 0
      %790 = vmatprep.subr.bf16.mxu0 0
      %791 = vmatpush1.bf16.msra.mxu0 0
      %792 = vmatprep.subr.bf16.mxu0 0
      %793 = vmatpush1.bf16.msra.mxu0 0
      %794 = vmatprep.subr.bf16.mxu0 0
      %795 = vmatpush1.bf16.msra.mxu0 0
      %796 = vmatprep.subr.bf16.mxu0 0
      %797 = vmatpush1.bf16.msra.mxu0 0
      %798 = vmatprep.subr.bf16.mxu0 0
      %799 = vmatpush1.bf16.msra.mxu0 0
      %800 = vmatprep.subr.bf16.mxu0 0
      %801 = vmatpush1.bf16.msra.mxu0 0
      %802 = vmatprep.mubr.bf16.mxu0 0
      %803 = vmatmul.mubr.bf16.gmra.mrb[0].mxu0 %v759
      %v804 = vpop.f32.mrb[0].mxu0
      %v805 = vadd.f32 0.0, %v804
      %v806 = vpop.f32.mrb[0].mxu0
      %v807 = vadd.f32 0.0, %v806
      %v808 = vpop.f32.mrb[0].mxu0
      %v809 = vpop.f32.mrb[0].mxu0
      %810 = vdwg.mxu0
      %811 = vmatprep.subr.bf16.mxu0 0
      %812 = vmatpush1.bf16.msra.mxu0 %v768
      %813 = vmatprep.subr.bf16.mxu0 0
      %814 = vmatpush1.bf16.msra.mxu0 0
      %815 = vmatprep.subr.bf16.mxu0 0
      %816 = vmatpush1.bf16.msra.mxu0 0
      %817 = vmatprep.subr.bf16.mxu0 0
      %818 = vmatpush1.bf16.msra.mxu0 0
      %819 = vmatprep.subr.bf16.mxu0 0
      %820 = vmatpush1.bf16.msra.mxu0 0
      %821 = vmatprep.subr.bf16.mxu0 0
      %822 = vmatpush1.bf16.msra.mxu0 0
      %823 = vmatprep.subr.bf16.mxu0 0
      %824 = vmatpush1.bf16.msra.mxu0 0
      %825 = vmatprep.subr.bf16.mxu0 0
      %826 = vmatpush1.bf16.msra.mxu0 0
      %827 = vmatprep.subr.bf16.mxu0 0
      %828 = vmatpush1.bf16.msra.mxu0 0
      %829 = vmatprep.subr.bf16.mxu0 0
      %830 = vmatpush1.bf16.msra.mxu0 0
      %831 = vmatprep.subr.bf16.mxu0 0
      %832 = vmatpush1.bf16.msra.mxu0 0
      %833 = vmatprep.subr.bf16.mxu0 0
      %834 = vmatpush1.bf16.msra.mxu0 0
      %835 = vmatprep.subr.bf16.mxu0 0
      %836 = vmatpush1.bf16.msra.mxu0 0
      %837 = vmatprep.subr.bf16.mxu0 0
      %838 = vmatpush1.bf16.msra.mxu0 0
      %839 = vmatprep.subr.bf16.mxu0 0
      %840 = vmatpush1.bf16.msra.mxu0 0
      %841 = vmatprep.subr.bf16.mxu0 0
      %842 = vmatpush1.bf16.msra.mxu0 0
      %843 = vmatprep.mubr.bf16.mxu0 0
      %844 = vmatmul.mubr.bf16.gmra.mrb[0].mxu0 %v759
      %v845 = vpop.f32.mrb[0].mxu0
      %v846 = vadd.f32 0.0, %v845
      %v847 = vpop.f32.mrb[0].mxu0
      %v848 = vpop.f32.mrb[0].mxu0
      %v849 = vpop.f32.mrb[0].mxu0
      %850 = vdwg.mxu0
      %v851 = vadd.f32 %v741, %v805
      %v852 = vadd.f32 %v742, %v807
      %v853 = vadd.f32 %v743, %v846
      %s854 = scalar_lea.vmem %s2, 20
      %v855 = vld [vmem:[%s854] sm:$0xf]
      %856 = vrot.lane.b32.xlu0 %v320, 108
      %v857 = vpop.permute.xlu0 %856
      %858 = vrot.lane.b32.xlu0 %v321, 108
      %v859 = vpop.permute.xlu0 %858
      %860 = vrot.lane.b32.xlu0 %v322, 108
      %v861 = vpop.permute.xlu0 %860
      %862 = vrot.lane.b32.xlu0 %v323, 108
      %v863 = vpop.permute.xlu0 %862
      %vm864 = vcmask 883712
      %v865 = vsel %vm864, %v857, %v859
      %v866 = vsel %vm864, %v859, %v861
      %v867 = vsel %vm864, %v861, %v863
      %v869 = vsel %vm336, %v855, 0
      %v872 = vsel %vm340, %v865, 0
      %v875 = vsel %vm340, %v866, 0
      %v878 = vsel %vm340, %v867, 0
      %880 = vmatprep.subr.bf16.mxu0 %v875
      %881 = vmatpush1.bf16.msra.mxu0 %v872
      %882 = vmatprep.subr.bf16.mxu0 0
      %883 = vmatpush1.bf16.msra.mxu0 0
      %884 = vmatprep.subr.bf16.mxu0 0
      %885 = vmatpush1.bf16.msra.mxu0 0
      %886 = vmatprep.subr.bf16.mxu0 0
      %887 = vmatpush1.bf16.msra.mxu0 0
      %888 = vmatprep.subr.bf16.mxu0 0
      %889 = vmatpush1.bf16.msra.mxu0 0
      %890 = vmatprep.subr.bf16.mxu0 0
      %891 = vmatpush1.bf16.msra.mxu0 0
      %892 = vmatprep.subr.bf16.mxu0 0
      %893 = vmatpush1.bf16.msra.mxu0 0
      %894 = vmatprep.subr.bf16.mxu0 0
      %895 = vmatpush1.bf16.msra.mxu0 0
      %896 = vmatprep.subr.bf16.mxu0 0
      %897 = vmatpush1.bf16.msra.mxu0 0
      %898 = vmatprep.subr.bf16.mxu0 0
      %899 = vmatpush1.bf16.msra.mxu0 0
      %900 = vmatprep.subr.bf16.mxu0 0
      %901 = vmatpush1.bf16.msra.mxu0 0
      %902 = vmatprep.subr.bf16.mxu0 0
      %903 = vmatpush1.bf16.msra.mxu0 0
      %904 = vmatprep.subr.bf16.mxu0 0
      %905 = vmatpush1.bf16.msra.mxu0 0
      %906 = vmatprep.subr.bf16.mxu0 0
      %907 = vmatpush1.bf16.msra.mxu0 0
      %908 = vmatprep.subr.bf16.mxu0 0
      %909 = vmatpush1.bf16.msra.mxu0 0
      %910 = vmatprep.subr.bf16.mxu0 0
      %911 = vmatpush1.bf16.msra.mxu0 0
      %912 = vmatprep.mubr.bf16.mxu0 0
      %913 = vmatmul.mubr.bf16.gmra.mrb[0].mxu0 %v869
      %v914 = vpop.f32.mrb[0].mxu0
      %v915 = vadd.f32 0.0, %v914
      %v916 = vpop.f32.mrb[0].mxu0
      %v917 = vadd.f32 0.0, %v916
      %v918 = vpop.f32.mrb[0].mxu0
      %v919 = vpop.f32.mrb[0].mxu0
      %920 = vdwg.mxu0
      %921 = vmatprep.subr.bf16.mxu0 0
      %922 = vmatpush1.bf16.msra.mxu0 %v878
      %923 = vmatprep.subr.bf16.mxu0 0
      %924 = vmatpush1.bf16.msra.mxu0 0
      %925 = vmatprep.subr.bf16.mxu0 0
      %926 = vmatpush1.bf16.msra.mxu0 0
      %927 = vmatprep.subr.bf16.mxu0 0
      %928 = vmatpush1.bf16.msra.mxu0 0
      %929 = vmatprep.subr.bf16.mxu0 0
      %930 = vmatpush1.bf16.msra.mxu0 0
      %931 = vmatprep.subr.bf16.mxu0 0
      %932 = vmatpush1.bf16.msra.mxu0 0
      %933 = vmatprep.subr.bf16.mxu0 0
      %934 = vmatpush1.bf16.msra.mxu0 0
      %935 = vmatprep.subr.bf16.mxu0 0
      %936 = vmatpush1.bf16.msra.mxu0 0
      %937 = vmatprep.subr.bf16.mxu0 0
      %938 = vmatpush1.bf16.msra.mxu0 0
      %939 = vmatprep.subr.bf16.mxu0 0
      %940 = vmatpush1.bf16.msra.mxu0 0
      %941 = vmatprep.subr.bf16.mxu0 0
      %942 = vmatpush1.bf16.msra.mxu0 0
      %943 = vmatprep.subr.bf16.mxu0 0
      %944 = vmatpush1.bf16.msra.mxu0 0
      %945 = vmatprep.subr.bf16.mxu0 0
      %946 = vmatpush1.bf16.msra.mxu0 0
      %947 = vmatprep.subr.bf16.mxu0 0
      %948 = vmatpush1.bf16.msra.mxu0 0
      %949 = vmatprep.subr.bf16.mxu0 0
      %950 = vmatpush1.bf16.msra.mxu0 0
      %951 = vmatprep.subr.bf16.mxu0 0
      %952 = vmatpush1.bf16.msra.mxu0 0
      %953 = vmatprep.mubr.bf16.mxu0 0
      %954 = vmatmul.mubr.bf16.gmra.mrb[0].mxu0 %v869
      %v955 = vpop.f32.mrb[0].mxu0
      %v956 = vadd.f32 0.0, %v955
      %v957 = vpop.f32.mrb[0].mxu0
      %v958 = vpop.f32.mrb[0].mxu0
      %v959 = vpop.f32.mrb[0].mxu0
      %960 = vdwg.mxu0
      %v961 = vadd.f32 %v851, %v915
      %v962 = vadd.f32 %v852, %v917
      %v963 = vadd.f32 %v853, %v956
      %s964 = scalar_lea.vmem %s2, 24
      %v965 = vld [vmem:[%s964] sm:$0xf]
      %966 = vrot.lane.b32.xlu0 %v320, 92
      %v967 = vpop.permute.xlu0 %966
      %968 = vrot.lane.b32.xlu0 %v321, 92
      %v969 = vpop.permute.xlu0 %968
      %970 = vrot.lane.b32.xlu0 %v322, 92
      %v971 = vpop.permute.xlu0 %970
      %972 = vrot.lane.b32.xlu0 %v323, 92
      %v973 = vpop.permute.xlu0 %972
      %vm974 = vcmask 752640
      %v975 = vsel %vm974, %v967, %v969
      %v976 = vsel %vm974, %v969, %v971
      %v977 = vsel %vm974, %v971, %v973
      %v979 = vsel %vm336, %v965, 0
      %v982 = vsel %vm340, %v975, 0
      %v985 = vsel %vm340, %v976, 0
      %v988 = vsel %vm340, %v977, 0
      %990 = vmatprep.subr.bf16.mxu0 %v985
      %991 = vmatpush1.bf16.msra.mxu0 %v982
      %992 = vmatprep.subr.bf16.mxu0 0
      %993 = vmatpush1.bf16.msra.mxu0 0
      %994 = vmatprep.subr.bf16.mxu0 0
      %995 = vmatpush1.bf16.msra.mxu0 0
      %996 = vmatprep.subr.bf16.mxu0 0
      %997 = vmatpush1.bf16.msra.mxu0 0
      %998 = vmatprep.subr.bf16.mxu0 0
      %999 = vmatpush1.bf16.msra.mxu0 0
      %1000 = vmatprep.subr.bf16.mxu0 0
      %1001 = vmatpush1.bf16.msra.mxu0 0
      %1002 = vmatprep.subr.bf16.mxu0 0
      %1003 = vmatpush1.bf16.msra.mxu0 0
      %1004 = vmatprep.subr.bf16.mxu0 0
      %1005 = vmatpush1.bf16.msra.mxu0 0
      %1006 = vmatprep.subr.bf16.mxu0 0
      %1007 = vmatpush1.bf16.msra.mxu0 0
      %1008 = vmatprep.subr.bf16.mxu0 0
      %1009 = vmatpush1.bf16.msra.mxu0 0
      %1010 = vmatprep.subr.bf16.mxu0 0
      %1011 = vmatpush1.bf16.msra.mxu0 0
      %1012 = vmatprep.subr.bf16.mxu0 0
      %1013 = vmatpush1.bf16.msra.mxu0 0
      %1014 = vmatprep.subr.bf16.mxu0 0
      %1015 = vmatpush1.bf16.msra.mxu0 0
      %1016 = vmatprep.subr.bf16.mxu0 0
      %1017 = vmatpush1.bf16.msra.mxu0 0
      %1018 = vmatprep.subr.bf16.mxu0 0
      %1019 = vmatpush1.bf16.msra.mxu0 0
      %1020 = vmatprep.subr.bf16.mxu0 0
      %1021 = vmatpush1.bf16.msra.mxu0 0
      %1022 = vmatprep.mubr.bf16.mxu0 0
      %1023 = vmatmul.mubr.bf16.gmra.mrb[0].mxu0 %v979
      %v1024 = vpop.f32.mrb[0].mxu0
      %v1025 = vadd.f32 0.0, %v1024
      %v1026 = vpop.f32.mrb[0].mxu0
      %v1027 = vadd.f32 0.0, %v1026
      %v1028 = vpop.f32.mrb[0].mxu0
      %v1029 = vpop.f32.mrb[0].mxu0
      %1030 = vdwg.mxu0
      %1031 = vmatprep.subr.bf16.mxu0 0
      %1032 = vmatpush1.bf16.msra.mxu0 %v988
      %1033 = vmatprep.subr.bf16.mxu0 0
      %1034 = vmatpush1.bf16.msra.mxu0 0
      %1035 = vmatprep.subr.bf16.mxu0 0
      %1036 = vmatpush1.bf16.msra.mxu0 0
      %1037 = vmatprep.subr.bf16.mxu0 0
      %1038 = vmatpush1.bf16.msra.mxu0 0
      %1039 = vmatprep.subr.bf16.mxu0 0
      %1040 = vmatpush1.bf16.msra.mxu0 0
      %1041 = vmatprep.subr.bf16.mxu0 0
      %1042 = vmatpush1.bf16.msra.mxu0 0
      %1043 = vmatprep.subr.bf16.mxu0 0
      %1044 = vmatpush1.bf16.msra.mxu0 0
      %1045 = vmatprep.subr.bf16.mxu0 0
      %1046 = vmatpush1.bf16.msra.mxu0 0
      %1047 = vmatprep.subr.bf16.mxu0 0
      %1048 = vmatpush1.bf16.msra.mxu0 0
      %1049 = vmatprep.subr.bf16.mxu0 0
      %1050 = vmatpush1.bf16.msra.mxu0 0
      %1051 = vmatprep.subr.bf16.mxu0 0
      %1052 = vmatpush1.bf16.msra.mxu0 0
      %1053 = vmatprep.subr.bf16.mxu0 0
      %1054 = vmatpush1.bf16.msra.mxu0 0
      %1055 = vmatprep.subr.bf16.mxu0 0
      %1056 = vmatpush1.bf16.msra.mxu0 0
      %1057 = vmatprep.subr.bf16.mxu0 0
      %1058 = vmatpush1.bf16.msra.mxu0 0
      %1059 = vmatprep.subr.bf16.mxu0 0
      %1060 = vmatpush1.bf16.msra.mxu0 0
      %1061 = vmatprep.subr.bf16.mxu0 0
      %1062 = vmatpush1.bf16.msra.mxu0 0
      %1063 = vmatprep.mubr.bf16.mxu0 0
      %1064 = vmatmul.mubr.bf16.gmra.mrb[0].mxu0 %v979
      %v1065 = vpop.f32.mrb[0].mxu0
      %v1066 = vadd.f32 0.0, %v1065
      %v1067 = vpop.f32.mrb[0].mxu0
      %v1068 = vpop.f32.mrb[0].mxu0
      %v1069 = vpop.f32.mrb[0].mxu0
      %1070 = vdwg.mxu0
      %v1071 = vadd.f32 %v961, %v1025
      %v1072 = vadd.f32 %v962, %v1027
      %v1073 = vadd.f32 %v963, %v1066
      %s1074 = scalar_lea.vmem %s2, 28
      %v1075 = vld [vmem:[%s1074] sm:$0xf]
      %1076 = vrot.lane.b32.xlu0 %v320, 91
      %v1077 = vpop.permute.xlu0 %1076
      %1078 = vrot.lane.b32.xlu0 %v321, 91
      %v1079 = vpop.permute.xlu0 %1078
      %1080 = vrot.lane.b32.xlu0 %v322, 91
      %v1081 = vpop.permute.xlu0 %1080
      %1082 = vrot.lane.b32.xlu0 %v323, 91
      %v1083 = vpop.permute.xlu0 %1082
      %vm1084 = vcmask 744448
      %v1085 = vsel %vm1084, %v1077, %v1079
      %v1086 = vsel %vm1084, %v1079, %v1081
      %v1087 = vsel %vm1084, %v1081, %v1083
      %v1089 = vsel %vm336, %v1075, 0
      %v1092 = vsel %vm340, %v1085, 0
      %v1095 = vsel %vm340, %v1086, 0
      %v1098 = vsel %vm340, %v1087, 0
      %1100 = vmatprep.subr.bf16.mxu0 %v1095
      %1101 = vmatpush1.bf16.msra.mxu0 %v1092
      %1102 = vmatprep.subr.bf16.mxu0 0
      %1103 = vmatpush1.bf16.msra.mxu0 0
      %1104 = vmatprep.subr.bf16.mxu0 0
      %1105 = vmatpush1.bf16.msra.mxu0 0
      %1106 = vmatprep.subr.bf16.mxu0 0
      %1107 = vmatpush1.bf16.msra.mxu0 0
      %1108 = vmatprep.subr.bf16.mxu0 0
      %1109 = vmatpush1.bf16.msra.mxu0 0
      %1110 = vmatprep.subr.bf16.mxu0 0
      %1111 = vmatpush1.bf16.msra.mxu0 0
      %1112 = vmatprep.subr.bf16.mxu0 0
      %1113 = vmatpush1.bf16.msra.mxu0 0
      %1114 = vmatprep.subr.bf16.mxu0 0
      %1115 = vmatpush1.bf16.msra.mxu0 0
      %1116 = vmatprep.subr.bf16.mxu0 0
      %1117 = vmatpush1.bf16.msra.mxu0 0
      %1118 = vmatprep.subr.bf16.mxu0 0
      %1119 = vmatpush1.bf16.msra.mxu0 0
      %1120 = vmatprep.subr.bf16.mxu0 0
      %1121 = vmatpush1.bf16.msra.mxu0 0
      %1122 = vmatprep.subr.bf16.mxu0 0
      %1123 = vmatpush1.bf16.msra.mxu0 0
      %1124 = vmatprep.subr.bf16.mxu0 0
      %1125 = vmatpush1.bf16.msra.mxu0 0
      %1126 = vmatprep.subr.bf16.mxu0 0
      %1127 = vmatpush1.bf16.msra.mxu0 0
      %1128 = vmatprep.subr.bf16.mxu0 0
      %1129 = vmatpush1.bf16.msra.mxu0 0
      %1130 = vmatprep.subr.bf16.mxu0 0
      %1131 = vmatpush1.bf16.msra.mxu0 0
      %1132 = vmatprep.mubr.bf16.mxu0 0
      %1133 = vmatmul.mubr.bf16.gmra.mrb[0].mxu0 %v1089
      %v1134 = vpop.f32.mrb[0].mxu0
      %v1135 = vadd.f32 0.0, %v1134
      %v1136 = vpop.f32.mrb[0].mxu0
      %v1137 = vadd.f32 0.0, %v1136
      %v1138 = vpop.f32.mrb[0].mxu0
      %v1139 = vpop.f32.mrb[0].mxu0
      %1140 = vdwg.mxu0
      %1141 = vmatprep.subr.bf16.mxu0 0
      %1142 = vmatpush1.bf16.msra.mxu0 %v1098
      %1143 = vmatprep.subr.bf16.mxu0 0
      %1144 = vmatpush1.bf16.msra.mxu0 0
      %1145 = vmatprep.subr.bf16.mxu0 0
      %1146 = vmatpush1.bf16.msra.mxu0 0
      %1147 = vmatprep.subr.bf16.mxu0 0
      %1148 = vmatpush1.bf16.msra.mxu0 0
      %1149 = vmatprep.subr.bf16.mxu0 0
      %1150 = vmatpush1.bf16.msra.mxu0 0
      %1151 = vmatprep.subr.bf16.mxu0 0
      %1152 = vmatpush1.bf16.msra.mxu0 0
      %1153 = vmatprep.subr.bf16.mxu0 0
      %1154 = vmatpush1.bf16.msra.mxu0 0
      %1155 = vmatprep.subr.bf16.mxu0 0
      %1156 = vmatpush1.bf16.msra.mxu0 0
      %1157 = vmatprep.subr.bf16.mxu0 0
      %1158 = vmatpush1.bf16.msra.mxu0 0
      %1159 = vmatprep.subr.bf16.mxu0 0
      %1160 = vmatpush1.bf16.msra.mxu0 0
      %1161 = vmatprep.subr.bf16.mxu0 0
      %1162 = vmatpush1.bf16.msra.mxu0 0
      %1163 = vmatprep.subr.bf16.mxu0 0
      %1164 = vmatpush1.bf16.msra.mxu0 0
      %1165 = vmatprep.subr.bf16.mxu0 0
      %1166 = vmatpush1.bf16.msra.mxu0 0
      %1167 = vmatprep.subr.bf16.mxu0 0
      %1168 = vmatpush1.bf16.msra.mxu0 0
      %1169 = vmatprep.subr.bf16.mxu0 0
      %1170 = vmatpush1.bf16.msra.mxu0 0
      %1171 = vmatprep.subr.bf16.mxu0 0
      %1172 = vmatpush1.bf16.msra.mxu0 0
      %1173 = vmatprep.mubr.bf16.mxu0 0
      %1174 = vmatmul.mubr.bf16.gmra.mrb[0].mxu0 %v1089
      %v1175 = vpop.f32.mrb[0].mxu0
      %v1176 = vadd.f32 0.0, %v1175
      %v1177 = vpop.f32.mrb[0].mxu0
      %v1178 = vpop.f32.mrb[0].mxu0
      %v1179 = vpop.f32.mrb[0].mxu0
      %1180 = vdwg.mxu0
      %v1181 = vadd.f32 %v1071, %v1135
      %v1182 = vadd.f32 %v1072, %v1137
      %v1183 = vadd.f32 %v1073, %v1176
      %s1184 = scalar_lea.vmem %s2, 32
      %v1185 = vld [vmem:[%s1184] sm:$0xf]
      %1186 = vrot.lane.b32.xlu0 %v320, 90
      %v1187 = vpop.permute.xlu0 %1186
      %1188 = vrot.lane.b32.xlu0 %v321, 90
      %v1189 = vpop.permute.xlu0 %1188
      %1190 = vrot.lane.b32.xlu0 %v322, 90
      %v1191 = vpop.permute.xlu0 %1190
      %1192 = vrot.lane.b32.xlu0 %v323, 90
      %v1193 = vpop.permute.xlu0 %1192
      %vm1194 = vcmask 736256
      %v1195 = vsel %vm1194, %v1187, %v1189
      %v1196 = vsel %vm1194, %v1189, %v1191
      %v1197 = vsel %vm1194, %v1191, %v1193
      %v1199 = vsel %vm336, %v1185, 0
      %v1202 = vsel %vm340, %v1195, 0
      %v1205 = vsel %vm340, %v1196, 0
      %v1208 = vsel %vm340, %v1197, 0
      %1210 = vmatprep.subr.bf16.mxu0 %v1205
      %1211 = vmatpush1.bf16.msra.mxu0 %v1202
      %1212 = vmatprep.subr.bf16.mxu0 0
      %1213 = vmatpush1.bf16.msra.mxu0 0
      %1214 = vmatprep.subr.bf16.mxu0 0
      %1215 = vmatpush1.bf16.msra.mxu0 0
      %1216 = vmatprep.subr.bf16.mxu0 0
      %1217 = vmatpush1.bf16.msra.mxu0 0
      %1218 = vmatprep.subr.bf16.mxu0 0
      %1219 = vmatpush1.bf16.msra.mxu0 0
      %1220 = vmatprep.subr.bf16.mxu0 0
      %1221 = vmatpush1.bf16.msra.mxu0 0
      %1222 = vmatprep.subr.bf16.mxu0 0
      %1223 = vmatpush1.bf16.msra.mxu0 0
      %1224 = vmatprep.subr.bf16.mxu0 0
      %1225 = vmatpush1.bf16.msra.mxu0 0
      %1226 = vmatprep.subr.bf16.mxu0 0
      %1227 = vmatpush1.bf16.msra.mxu0 0
      %1228 = vmatprep.subr.bf16.mxu0 0
      %1229 = vmatpush1.bf16.msra.mxu0 0
      %1230 = vmatprep.subr.bf16.mxu0 0
      %1231 = vmatpush1.bf16.msra.mxu0 0
      %1232 = vmatprep.subr.bf16.mxu0 0
      %1233 = vmatpush1.bf16.msra.mxu0 0
      %1234 = vmatprep.subr.bf16.mxu0 0
      %1235 = vmatpush1.bf16.msra.mxu0 0
      %1236 = vmatprep.subr.bf16.mxu0 0
      %1237 = vmatpush1.bf16.msra.mxu0 0
      %1238 = vmatprep.subr.bf16.mxu0 0
      %1239 = vmatpush1.bf16.msra.mxu0 0
      %1240 = vmatprep.subr.bf16.mxu0 0
      %1241 = vmatpush1.bf16.msra.mxu0 0
      %1242 = vmatprep.mubr.bf16.mxu0 0
      %1243 = vmatmul.mubr.bf16.gmra.mrb[0].mxu0 %v1199
      %v1244 = vpop.f32.mrb[0].mxu0
      %v1245 = vadd.f32 0.0, %v1244
      %v1246 = vpop.f32.mrb[0].mxu0
      %v1247 = vadd.f32 0.0, %v1246
      %v1248 = vpop.f32.mrb[0].mxu0
      %v1249 = vpop.f32.mrb[0].mxu0
      %1250 = vdwg.mxu0
      %1251 = vmatprep.subr.bf16.mxu0 0
      %1252 = vmatpush1.bf16.msra.mxu0 %v1208
      %1253 = vmatprep.subr.bf16.mxu0 0
      %1254 = vmatpush1.bf16.msra.mxu0 0
      %1255 = vmatprep.subr.bf16.mxu0 0
      %1256 = vmatpush1.bf16.msra.mxu0 0
      %1257 = vmatprep.subr.bf16.mxu0 0
      %1258 = vmatpush1.bf16.msra.mxu0 0
      %1259 = vmatprep.subr.bf16.mxu0 0
      %1260 = vmatpush1.bf16.msra.mxu0 0
      %1261 = vmatprep.subr.bf16.mxu0 0
      %1262 = vmatpush1.bf16.msra.mxu0 0
      %1263 = vmatprep.subr.bf16.mxu0 0
      %1264 = vmatpush1.bf16.msra.mxu0 0
      %1265 = vmatprep.subr.bf16.mxu0 0
      %1266 = vmatpush1.bf16.msra.mxu0 0
      %1267 = vmatprep.subr.bf16.mxu0 0
      %1268 = vmatpush1.bf16.msra.mxu0 0
      %1269 = vmatprep.subr.bf16.mxu0 0
      %1270 = vmatpush1.bf16.msra.mxu0 0
      %1271 = vmatprep.subr.bf16.mxu0 0
      %1272 = vmatpush1.bf16.msra.mxu0 0
      %1273 = vmatprep.subr.bf16.mxu0 0
      %1274 = vmatpush1.bf16.msra.mxu0 0
      %1275 = vmatprep.subr.bf16.mxu0 0
      %1276 = vmatpush1.bf16.msra.mxu0 0
      %1277 = vmatprep.subr.bf16.mxu0 0
      %1278 = vmatpush1.bf16.msra.mxu0 0
      %1279 = vmatprep.subr.bf16.mxu0 0
      %1280 = vmatpush1.bf16.msra.mxu0 0
      %1281 = vmatprep.subr.bf16.mxu0 0
      %1282 = vmatpush1.bf16.msra.mxu0 0
      %1283 = vmatprep.mubr.bf16.mxu0 0
      %1284 = vmatmul.mubr.bf16.gmra.mrb[0].mxu0 %v1199
      %v1285 = vpop.f32.mrb[0].mxu0
      %v1286 = vadd.f32 0.0, %v1285
      %v1287 = vpop.f32.mrb[0].mxu0
      %v1288 = vpop.f32.mrb[0].mxu0
      %v1289 = vpop.f32.mrb[0].mxu0
      %1290 = vdwg.mxu0
      %v1291 = vadd.f32 %v1181, %v1245
      %v1292 = vadd.f32 %v1182, %v1247
      %v1293 = vadd.f32 %v1183, %v1286
      %v1294 = vld [vmem:[%s3] sm:$0xff]
      %1296 = vset.pattern.permute.xlu0 0
      %1297 = vperm.xlu0 %1296, %v1294
      %v1298 = vpop.permute.xlu0 %1297
      %v1300 = vadd.f32 %v1291, %v1298
      %v1301 = vadd.f32 %v1292, %v1298
      %v1302 = vadd.f32 %v1293, %v1298
      %1303 = vst [vmem:[%s300] sm:$0xff] %v1300
      %1304 = vst [vmem:[%s300 + $0x8] sm:$0xff] %v1301
      %1305 = vst [vmem:[%s300 + $0x10] sm:$0xff] %v1302
      %s1306 = smul.u32 3, %s20
      %p1307 = scmp.lt.s32.totalorder %s19, 3
      %s1308 = scalar_select %p1307, %s19, 3
      %p1309 = scmp.lt.s32.totalorder %s1306, 2
      %s1310 = scalar_select %p1309, %s1306, 2
      %s1311 = smul.addr %s1308, 3
      %s1312 = sadd.s32 %s1310, %s1311
      %s1313 = smul.addr %s1312, 8
      %s1314 = scalar_lea.vmem %s4, %s1313
      // Predicated region
      $region37: #{soft_comp_forward.3} parent=35 // pred_check
        %p1315 = pneg %p149
      $region38: #{soft_comp_forward.3} parent=35 // pred_check_branch
        %1317 = sbr.rel (%p1315) target = $region40
      $region39: #{soft_comp_forward.3} parent=35 // pred_region
        %s1318 = smul.u32 3, %s20
      $region40: #{soft_comp_forward.3} parent=35 // pred_fallthru
        _
    $region36: #{soft_comp_forward.3} parent=5 // pred_fallthru
      _
    %p1319 = scmp.le.s32.totalorder 2, %s10
    // Predicated region
    $region41: #{soft_comp_forward.3} parent=5 // pred_check
      %p1320 = pneg %p1319
    $region42: #{soft_comp_forward.3} parent=5 // pred_check_branch
      %1322 = sbr.rel (%p1320) target = $region44
    $region43: #{soft_comp_forward.3} parent=5 // pred_region
      %s1323 = ssub.s32 %s10, 2
      // Predicated region
      $region45: #{soft_comp_forward.3} parent=43 // pred_check
        %p1324 = pneg %p155
      $region46: #{soft_comp_forward.3} parent=43 // pred_check_branch
        %1326 = sbr.rel (%p1324) target = $region48
      $region47: #{soft_comp_forward.3} parent=43 // pred_region
        %s1327 = smul.u32 3, %s22
        %p1328 = scmp.lt.s32.totalorder %s21, 3
        %s1329 = scalar_select %p1328, %s21, 3
        %p1330 = scmp.lt.s32.totalorder %s1327, 2
        %s1331 = scalar_select %p1330, %s1327, 2
        %s1332 = smul.addr %s1329, 3
        %s1333 = sadd.s32 %s1331, %s1332
        %s1334 = smul.addr %s1333, 8
        %s1335 = scalar_lea.vmem %s4, %s1334
      $region48: #{soft_comp_forward.3} parent=43 // pred_fallthru
        _
    $region44: #{soft_comp_forward.3} parent=5 // pred_fallthru
      _
  $region6: #{soft_comp_forward.3} parent=0 // loop_footer
    %s14 = sadd.s32 1, %s10
  $region7: #{soft_comp_forward.3} parent=0 // loop_footer_branch
    %9 = sbr.rel target = $region3
  $region8: #{soft_comp_forward.3} parent=0 // loop_exit
    _

</llo_original>
